<compile_context>
chip_gen: v7x
topology: tpu7x:2x2x1
jax: 0.10.0
libtpu: 0.0.40
codegen_flags: <defaults>
</compile_context>

<pallas_src>
import jax
import jax.numpy as jnp
from jax import lax
from jax.experimental import pallas as pl
from jax.experimental.pallas import tpu as pltpu


def _round_up(x, m):
    return ((x + m - 1) // m) * m


def _pick_batch_tile(B):
    # bf16 packs 16 rows per sublane group -> multiples of 16 for small B;
    # 256/512-row tiles for large B feed the 256-wide MXU on v6e/v7x.
    if B >= 512:
        return 512
    if B >= 256:
        return 256
    if B >= 128:
        return 128
    return _round_up(max(B, 1), 16)


# ---------------------------------------------------------------------------
# Fused kernel: one-hot / bag-count gathers (MXU) + 2-layer MLP (MXU)
# ---------------------------------------------------------------------------
def _make_fused_kernel(n_cat, cat_vpads, bag_vpads, bag_lens, mode, TB):
    n_bag = len(bag_vpads)

    def kernel(*refs):
        it = iter(refs)
        cat_idx_ref = next(it) if n_cat else None            # [TB, n_cat] i32
        bag_idx_refs = [next(it) for _ in range(n_bag)]       # [TB, L_j]  i32
        num_ref = next(it)                                    # [TB, Dn_pad] bf16
        fcat_refs = [next(it) for _ in range(n_cat)]          # [Vp_j, H_pad] bf16
        fbag_refs = [next(it) for _ in range(n_bag)]          # [Vp_j, H_pad] bf16
        w1n_ref = next(it)                                    # [Dn_pad, H_pad] bf16
        b1_ref = next(it)                                     # [1, H_pad] bf16
        w2_ref = next(it)                                     # [H_pad, C_pad] bf16
        b2_ref = next(it)                                     # [1, C_pad] f32
        o_ref = next(it)                                      # [TB, C_pad] f32

        # Numeric contribution (K already 128-aligned).
        h = jnp.dot(num_ref[...], w1n_ref[...],
                    preferred_element_type=jnp.float32)       # [TB, H_pad] f32

        # nn.Embedding: exact one-hot gather on the MXU against the folded
        # (table @ W1-rows) matrix.  padding_idx rows were zeroed at init.
        if n_cat:
            cat_idx = cat_idx_ref[...]
            for j in range(n_cat):
                vp = cat_vpads[j]
                iota = lax.broadcasted_iota(jnp.int32, (TB, vp), 1)
                onehot = jnp.where(iota == cat_idx[:, j:j + 1], 1.0, 0.0)
                h = h + jnp.dot(onehot.astype(jnp.bfloat16), fcat_refs[j][...],
                                preferred_element_type=jnp.float32)

        # nn.EmbeddingBag: per-vocab bag-count matrix x folded table (== bag
        # sum), scaled by 1/L afterwards for 'mean' (exact rewrite).
        for j in range(n_bag):
            vp, L = bag_vpads[j], bag_lens[j]
            bag = bag_idx_refs[j][...]
            iota = lax.broadcasted_iota(jnp.int32, (TB, vp), 1)
            counts = jnp.zeros((TB, vp), jnp.float32)
            for l in range(L):                                # tiny static unroll
                counts = counts + jnp.where(iota == bag[:, l:l + 1], 1.0, 0.0)
            contrib = jnp.dot(counts.astype(jnp.bfloat16), fbag_refs[j][...],
                              preferred_element_type=jnp.float32)
            if mode == "mean":
                contrib = contrib * (1.0 / L)
            h = h + contrib

        # Bias + ReLU, bf16 intermediate into the second MXU pass (f32 acc).
        h = jnp.maximum(h + b1_ref[...].astype(jnp.float32), 0.0)
        out = jnp.dot(h.astype(jnp.bfloat16), w2_ref[...],
                      preferred_element_type=jnp.float32)
        o_ref[...] = out + b2_ref[...]                        # lane-dense store

    return kernel


# ---------------------------------------------------------------------------
# ContextModel: parameters + fused forward
# ---------------------------------------------------------------------------
class ContextModelJAX:
    def __init__(self, key, categorical_confs, merchant_confs, numeric_dim,
                 hidden_size, n_output_classes, embeddingbag_mode="mean"):
        assert embeddingbag_mode in ("mean", "sum")
        self.embeddingbag_mode = embeddingbag_mode
        self.categorical_confs = list(categorical_confs)     # [(vocab, dim)]
        self.merchant_confs = list(merchant_confs)           # [(vocab, dim)]
        self.categorical_fcounts = len(self.categorical_confs)
        self.merchant_fcounts = len(self.merchant_confs)
        self.numeric_fcounts = 1
        self.numeric_dim = numeric_dim

        cat_dim = sum(d for _, d in self.categorical_confs)
        mer_dim = sum(d for _, d in self.merchant_confs)
        self.input_size = cat_dim + mer_dim + numeric_dim
        self.hidden_size = hidden_size
        self.n_output_classes = n_output_classes

        self.H_pad = _round_up(hidden_size, 128)
        self.C_pad = _round_up(n_output_classes, 128)
        self.Dn_pad = _round_up(numeric_dim, 128)

        n_keys = self.categorical_fcounts + self.merchant_fcounts + 4
        keys = list(jax.random.split(key, n_keys))

        # f32 master parameters (same structure as the PyTorch module).
        self.categorical_embeddings = []
        for (vocab, dim) in self.categorical_confs:
            tbl = jax.random.normal(keys.pop(0), (vocab, dim), jnp.float32) * 0.1
            tbl = tbl.at[vocab - 1].set(0.0)                  # padding_idx row
            self.categorical_embeddings.append(tbl)

        self.merchant_set_embeddings = []
        for (vocab, dim) in self.merchant_confs:
            tbl = jax.random.normal(keys.pop(0), (vocab, dim), jnp.float32) * 0.1
            self.merchant_set_embeddings.append(tbl)

        self.w1 = jax.random.normal(keys.pop(0), (self.input_size, hidden_size),
                                    jnp.float32) / jnp.sqrt(float(self.input_size))
        self.b1 = jax.random.normal(keys.pop(0), (hidden_size,), jnp.float32) * 0.05
        self.w2 = jax.random.normal(keys.pop(0), (hidden_size, n_output_classes),
                                    jnp.float32) / jnp.sqrt(float(hidden_size))
        self.b2 = jax.random.normal(keys.pop(0), (n_output_classes,), jnp.float32) * 0.05

        self._prepare_kernel_params()

    def _prepare_kernel_params(self):
        H, Hp, C, Cp = self.hidden_size, self.H_pad, self.n_output_classes, self.C_pad

        # Fold each embedding table into its W1 row block once (f32), pad the
        # vocab to a lane-aligned 128 multiple, cast to bf16 for the MXU.
        self.cat_vpads, self.folded_cat = [], []
        off = 0
        for (vocab, dim), tbl in zip(self.categorical_confs, self.categorical_embeddings):
            fold = tbl @ self.w1[off:off + dim, :]                        # [V, H]
            vp = _round_up(vocab, 128)
            pad = jnp.zeros((vp, Hp), jnp.float32).at[:vocab, :H].set(fold)
            self.cat_vpads.append(vp)
            self.folded_cat.append(pad.astype(jnp.bfloat16))
            off += dim

        self.bag_vpads, self.folded_bag = [], []
        for (vocab, dim), tbl in zip(self.merchant_confs, self.merchant_set_embeddings):
            fold = tbl @ self.w1[off:off + dim, :]
            vp = _round_up(vocab, 128)
            pad = jnp.zeros((vp, Hp), jnp.float32).at[:vocab, :H].set(fold)
            self.bag_vpads.append(vp)
            self.folded_bag.append(pad.astype(jnp.bfloat16))
            off += dim

        w1n = jnp.zeros((self.Dn_pad, Hp), jnp.float32)
        w1n = w1n.at[:self.numeric_dim, :H].set(self.w1[off:off + self.numeric_dim, :])
        self.w1_num = w1n.astype(jnp.bfloat16)

        self.b1_pad = jnp.zeros((1, Hp), jnp.float32).at[0, :H].set(self.b1).astype(jnp.bfloat16)
        self.w2_pad = jnp.zeros((Hp, Cp), jnp.float32).at[:H, :C].set(self.w2).astype(jnp.bfloat16)
        self.b2_pad = jnp.zeros((1, Cp), jnp.float32).at[0, :C].set(self.b2)
        # TODO(synk): optional int8 (v5e/v6e) / fp8 (v7x) weight quantization once
        # the kernel is MXU- or weight-DMA-bound at production sizes.

    def forward(self, x):
        """x: list ordered like the PyTorch forward:
             x[:cat]            int indices, each [B]
             x[cat:cat+mer]     int bag indices, each [B, L]
             x[cat+mer:...+1]   float numeric, [B, numeric_dim]
        """
        c, m = self.categorical_fcounts, self.merchant_fcounts
        categorical_sample = x[:c]
        merchant_sample = x[c:c + m]
        numeric_sample = x[c + m:c + m + self.numeric_fcounts]

        numeric = jnp.concatenate(numeric_sample, axis=1)
        B = numeric.shape[0]
        TB = _pick_batch_tile(B)
        B_pad = _round_up(B, TB)

        # Tiny wrapper-side prep only: stack / cast / pad the index & numeric
        # inputs.  All feature assembly happens inside the kernel.
        operands = []
        if c:
            cat_idx = jnp.stack([idx.astype(jnp.int32) for idx in categorical_sample], axis=1)
            operands.append(jnp.pad(cat_idx, ((0, B_pad - B), (0, 0))))
        bag_lens = []
        for idx in merchant_sample:
            idx = idx.astype(jnp.int32)
            bag_lens.append(idx.shape[1])
            operands.append(jnp.pad(idx, ((0, B_pad - B), (0, 0))))
        num_bf16 = numeric.astype(jnp.bfloat16)               # cast BEFORE padding
        operands.append(jnp.pad(num_bf16,
                                ((0, B_pad - B), (0, self.Dn_pad - self.numeric_dim))))
        operands += self.folded_cat + self.folded_bag
        operands += [self.w1_num, self.b1_pad, self.w2_pad, self.b2_pad]

        kernel = _make_fused_kernel(c, tuple(self.cat_vpads), tuple(self.bag_vpads),
                                    tuple(bag_lens), self.embeddingbag_mode, TB)

        def batch_spec(width):
            return pl.BlockSpec((TB, width), lambda i: (i, 0))

        def run(single_buffer_weights):
            def const_spec(shape):
                if single_buffer_weights:
                    # Constant index_map -> no benefit from double buffering;
                    # halves the resident weight footprint (matters on v7x 64MiB).
                    return pl.BlockSpec(shape, lambda i: (0, 0),
                                        pipeline_mode=pl.Buffered(1))
                return pl.BlockSpec(shape, lambda i: (0, 0))

            in_specs = []
            if c:
                in_specs.append(batch_spec(c))
            in_specs += [batch_spec(L) for L in bag_lens]
            in_specs.append(batch_spec(self.Dn_pad))
            in_specs += [const_spec(f.shape) for f in self.folded_cat]
            in_specs += [const_spec(f.shape) for f in self.folded_bag]
            in_specs += [const_spec(self.w1_num.shape), const_spec(self.b1_pad.shape),
                         const_spec(self.w2_pad.shape), const_spec(self.b2_pad.shape)]

            return pl.pallas_call(
                kernel,
                out_shape=jax.ShapeDtypeStruct((B_pad, self.C_pad), jnp.float32),
                grid_spec=pltpu.PrefetchScalarGridSpec(
                    num_scalar_prefetch=0,
                    grid=(B_pad // TB,),
                    in_specs=in_specs,
                    out_specs=pl.BlockSpec((TB, self.C_pad), lambda i: (i, 0)),
                ),
                compiler_params=pltpu.CompilerParams(
                    # TODO(synk): on v7x verify both TensorCores pick up the batch
                    # axis; if one TC idles, switch to pltpu.CORE_PARALLEL.
                    dimension_semantics=("parallel",),
                    vmem_limit_bytes=32 * 1024 * 1024,
                ),
            )(*operands)

        try:
            out = run(single_buffer_weights=True)
        except Exception:
            # This jax build rejects pipeline_mode on pallas_call BlockSpecs ->
            # fall back to default double-buffered constant blocks.
            out = run(single_buffer_weights=False)

        return out[:B, :self.n_output_classes]


# ---------------------------------------------------------------------------
# Pure-JAX f32 reference (mirrors the PyTorch forward exactly)
# ---------------------------------------------------------------------------
def reference_forward(model, x):
    c, m = model.categorical_fcounts, model.merchant_fcounts
    cat = jnp.concatenate(
        [tbl[idx] for idx, tbl in zip(x[:c], model.categorical_embeddings)], axis=1)
    bags = []
    for idx, tbl in zip(x[c:c + m], model.merchant_set_embeddings):
        g = tbl[idx]                                          # [B, L, d]
        bags.append(jnp.mean(g, axis=1) if model.embeddingbag_mode == "mean"
                    else jnp.sum(g, axis=1))
    mer = jnp.concatenate(bags, axis=1)
    num = jnp.concatenate(x[c + m:c + m + 1], axis=1)
    inp = jnp.concatenate((cat, mer, num), axis=1)
    h = jnp.maximum(jnp.dot(inp, model.w1, precision=lax.Precision.HIGHEST) + model.b1, 0.0)
    return jnp.dot(h, model.w2, precision=lax.Precision.HIGHEST) + model.b2


# ---------------------------------------------------------------------------
# Main
# ---------------------------------------------------------------------------
if __name__ == "__main__":
    key = jax.random.PRNGKey(0)
    k_params, k_c0, k_c1, k_m0, k_num = jax.random.split(key, 5)

    B = 8                     # batch
    L = 5                     # merchant bag length
    numeric_dim = 4
    categorical_confs = [(16, 8), (12, 4)]   # (vocab, emb_dim); padding_idx=vocab-1
    merchant_confs = [(20, 8)]
    hidden_size = 32
    n_output_classes = 4

    model = ContextModelJAX(k_params, categorical_confs, merchant_confs,
                            numeric_dim, hidden_size, n_output_classes,
                            embeddingbag_mode="mean")

    # Inputs in the same order the PyTorch forward slices them.
    cat0 = jax.random.randint(k_c0, (B,), 0, categorical_confs[0][0], jnp.int32)
    cat1 = jax.random.randint(k_c1, (B,), 0, categorical_confs[1][0], jnp.int32)
    mer0 = jax.random.randint(k_m0, (B, L), 0, merchant_confs[0][0], jnp.int32)
    numeric = jax.random.normal(k_num, (B, numeric_dim), jnp.float32)
    x = [cat0, cat1, mer0, numeric]

    out = jax.block_until_ready(model.forward(x))
    assert out.shape == (B, n_output_classes), out.shape
    assert jnp.all(jnp.isfinite(out))

    # Tolerance-checked f32 reference (bf16 MXU path vs f32 math).
    ref = jax.block_until_ready(reference_forward(model, x))
    max_err = float(jnp.max(jnp.abs(out - ref)))
    assert jnp.allclose(out, ref, atol=8e-2, rtol=8e-2), max_err

    print("KERNEL_OK")
</pallas_src>

<mosaic_0001>
module attributes {stable_mosaic.version = 11 : i64} {
  func.func @kernel(%arg0: i32, %arg1: memref<16x2xi32, #tpu.memory_space<vmem>>, %arg2: memref<16x5xi32, #tpu.memory_space<vmem>>, %arg3: memref<16x128xbf16, #tpu.memory_space<vmem>>, %arg4: memref<128x128xbf16, #tpu.memory_space<vmem>>, %arg5: memref<128x128xbf16, #tpu.memory_space<vmem>>, %arg6: memref<128x128xbf16, #tpu.memory_space<vmem>>, %arg7: memref<128x128xbf16, #tpu.memory_space<vmem>>, %arg8: memref<1x128xbf16, #tpu.memory_space<vmem>>, %arg9: memref<128x128xbf16, #tpu.memory_space<vmem>>, %arg10: memref<1x128xf32, #tpu.memory_space<vmem>>, %arg11: memref<16x128xf32, #tpu.memory_space<vmem>>) attributes {dimension_semantics = [#tpu.dimension_semantics<parallel>], iteration_bounds = array<i64: 1>, scalar_prefetch = 0 : i64, scratch_operands = 0 : i64, tpu.core_type = #tpu.core_type<tc>, window_params = [{transform_indices = @transform_0, window_bounds = array<i64: 16, 2>}, {transform_indices = @transform_1, window_bounds = array<i64: 16, 5>}, {transform_indices = @transform_2, window_bounds = array<i64: 16, 128>}, {pipeline_mode = #tpu.pipeline_mode<synchronous>, transform_indices = @transform_3, window_bounds = array<i64: 128, 128>}, {pipeline_mode = #tpu.pipeline_mode<synchronous>, transform_indices = @transform_4, window_bounds = array<i64: 128, 128>}, {pipeline_mode = #tpu.pipeline_mode<synchronous>, transform_indices = @transform_5, window_bounds = array<i64: 128, 128>}, {pipeline_mode = #tpu.pipeline_mode<synchronous>, transform_indices = @transform_6, window_bounds = array<i64: 128, 128>}, {pipeline_mode = #tpu.pipeline_mode<synchronous>, transform_indices = @transform_7, window_bounds = array<i64: 1, 128>}, {pipeline_mode = #tpu.pipeline_mode<synchronous>, transform_indices = @transform_8, window_bounds = array<i64: 128, 128>}, {pipeline_mode = #tpu.pipeline_mode<synchronous>, transform_indices = @transform_9, window_bounds = array<i64: 1, 128>}, {transform_indices = @transform_10, window_bounds = array<i64: 16, 128>}]} {
    %c0 = arith.constant 0 : index
    %c0_0 = arith.constant 0 : index
    %0 = vector.load %arg3[%c0, %c0_0] : memref<16x128xbf16, #tpu.memory_space<vmem>>, vector<16x128xbf16>
    %c0_1 = arith.constant 0 : index
    %c0_2 = arith.constant 0 : index
    %1 = vector.load %arg7[%c0_1, %c0_2] : memref<128x128xbf16, #tpu.memory_space<vmem>>, vector<128x128xbf16>
    %cst = arith.constant dense<0.000000e+00> : vector<16x128xf32>
    %2 = tpu.matmul %0, %1, %cst {dimension_numbers = #tpu.dot_dimension_numbers<[1], [0], [0], [1], [0, 0, 1, 1], [], []>} : vector<16x128xbf16>, vector<128x128xbf16>, vector<16x128xf32> -> vector<16x128xf32>
    %c0_3 = arith.constant 0 : index
    %c0_4 = arith.constant 0 : index
    %3 = vector.load %arg1[%c0_3, %c0_4] : memref<16x2xi32, #tpu.memory_space<vmem>>, vector<16x2xi32>
    %4 = tpu.iota {dimensions = array<i32: 1>} : vector<16x128xi32>
    %5 = vector.extract_strided_slice %3 {offsets = [0, 0], sizes = [16, 1], strides = [1, 1]} : vector<16x2xi32> to vector<16x1xi32>
    %6 = vector.broadcast %5 : vector<16x1xi32> to vector<16x128xi32>
    %7 = arith.cmpi eq, %4, %6 : vector<16x128xi32>
    %cst_5 = arith.constant 1.000000e+00 : f32
    %cst_6 = arith.constant 0.000000e+00 : f32
    %8 = vector.broadcast %cst_5 : f32 to vector<16x128xf32>
    %9 = vector.broadcast %cst_6 : f32 to vector<16x128xf32>
    %10 = arith.select %7, %8, %9 : vector<16x128xi1>, vector<16x128xf32>
    %11 = arith.truncf %10 : vector<16x128xf32> to vector<16x128xbf16>
    %c0_7 = arith.constant 0 : index
    %c0_8 = arith.constant 0 : index
    %12 = vector.load %arg4[%c0_7, %c0_8] : memref<128x128xbf16, #tpu.memory_space<vmem>>, vector<128x128xbf16>
    %cst_9 = arith.constant dense<0.000000e+00> : vector<16x128xf32>
    %13 = tpu.matmul %11, %12, %cst_9 {dimension_numbers = #tpu.dot_dimension_numbers<[1], [0], [0], [1], [0, 0, 1, 1], [], []>} : vector<16x128xbf16>, vector<128x128xbf16>, vector<16x128xf32> -> vector<16x128xf32>
    %14 = arith.addf %2, %13 : vector<16x128xf32>
    %15 = tpu.iota {dimensions = array<i32: 1>} : vector<16x128xi32>
    %16 = vector.extract_strided_slice %3 {offsets = [0, 1], sizes = [16, 1], strides = [1, 1]} : vector<16x2xi32> to vector<16x1xi32>
    %17 = vector.broadcast %16 : vector<16x1xi32> to vector<16x128xi32>
    %18 = arith.cmpi eq, %15, %17 : vector<16x128xi32>
    %cst_10 = arith.constant 1.000000e+00 : f32
    %cst_11 = arith.constant 0.000000e+00 : f32
    %19 = vector.broadcast %cst_10 : f32 to vector<16x128xf32>
    %20 = vector.broadcast %cst_11 : f32 to vector<16x128xf32>
    %21 = arith.select %18, %19, %20 : vector<16x128xi1>, vector<16x128xf32>
    %22 = arith.truncf %21 : vector<16x128xf32> to vector<16x128xbf16>
    %c0_12 = arith.constant 0 : index
    %c0_13 = arith.constant 0 : index
    %23 = vector.load %arg5[%c0_12, %c0_13] : memref<128x128xbf16, #tpu.memory_space<vmem>>, vector<128x128xbf16>
    %cst_14 = arith.constant dense<0.000000e+00> : vector<16x128xf32>
    %24 = tpu.matmul %22, %23, %cst_14 {dimension_numbers = #tpu.dot_dimension_numbers<[1], [0], [0], [1], [0, 0, 1, 1], [], []>} : vector<16x128xbf16>, vector<128x128xbf16>, vector<16x128xf32> -> vector<16x128xf32>
    %25 = arith.addf %14, %24 : vector<16x128xf32>
    %c0_15 = arith.constant 0 : index
    %c0_16 = arith.constant 0 : index
    %26 = vector.load %arg2[%c0_15, %c0_16] : memref<16x5xi32, #tpu.memory_space<vmem>>, vector<16x5xi32>
    %27 = tpu.iota {dimensions = array<i32: 1>} : vector<16x128xi32>
    %cst_17 = arith.constant 0.000000e+00 : f32
    %28 = vector.broadcast %cst_17 : f32 to vector<16x128xf32>
    %29 = vector.extract_strided_slice %26 {offsets = [0, 0], sizes = [16, 1], strides = [1, 1]} : vector<16x5xi32> to vector<16x1xi32>
    %30 = vector.broadcast %29 : vector<16x1xi32> to vector<16x128xi32>
    %31 = arith.cmpi eq, %27, %30 : vector<16x128xi32>
    %cst_18 = arith.constant 1.000000e+00 : f32
    %cst_19 = arith.constant 0.000000e+00 : f32
    %32 = vector.broadcast %cst_18 : f32 to vector<16x128xf32>
    %33 = vector.broadcast %cst_19 : f32 to vector<16x128xf32>
    %34 = arith.select %31, %32, %33 : vector<16x128xi1>, vector<16x128xf32>
    %35 = arith.addf %28, %34 : vector<16x128xf32>
    %36 = vector.extract_strided_slice %26 {offsets = [0, 1], sizes = [16, 1], strides = [1, 1]} : vector<16x5xi32> to vector<16x1xi32>
    %37 = vector.broadcast %36 : vector<16x1xi32> to vector<16x128xi32>
    %38 = arith.cmpi eq, %27, %37 : vector<16x128xi32>
    %cst_20 = arith.constant 1.000000e+00 : f32
    %cst_21 = arith.constant 0.000000e+00 : f32
    %39 = vector.broadcast %cst_20 : f32 to vector<16x128xf32>
    %40 = vector.broadcast %cst_21 : f32 to vector<16x128xf32>
    %41 = arith.select %38, %39, %40 : vector<16x128xi1>, vector<16x128xf32>
    %42 = arith.addf %35, %41 : vector<16x128xf32>
    %43 = vector.extract_strided_slice %26 {offsets = [0, 2], sizes = [16, 1], strides = [1, 1]} : vector<16x5xi32> to vector<16x1xi32>
    %44 = vector.broadcast %43 : vector<16x1xi32> to vector<16x128xi32>
    %45 = arith.cmpi eq, %27, %44 : vector<16x128xi32>
    %cst_22 = arith.constant 1.000000e+00 : f32
    %cst_23 = arith.constant 0.000000e+00 : f32
    %46 = vector.broadcast %cst_22 : f32 to vector<16x128xf32>
    %47 = vector.broadcast %cst_23 : f32 to vector<16x128xf32>
    %48 = arith.select %45, %46, %47 : vector<16x128xi1>, vector<16x128xf32>
    %49 = arith.addf %42, %48 : vector<16x128xf32>
    %50 = vector.extract_strided_slice %26 {offsets = [0, 3], sizes = [16, 1], strides = [1, 1]} : vector<16x5xi32> to vector<16x1xi32>
    %51 = vector.broadcast %50 : vector<16x1xi32> to vector<16x128xi32>
    %52 = arith.cmpi eq, %27, %51 : vector<16x128xi32>
    %cst_24 = arith.constant 1.000000e+00 : f32
    %cst_25 = arith.constant 0.000000e+00 : f32
    %53 = vector.broadcast %cst_24 : f32 to vector<16x128xf32>
    %54 = vector.broadcast %cst_25 : f32 to vector<16x128xf32>
    %55 = arith.select %52, %53, %54 : vector<16x128xi1>, vector<16x128xf32>
    %56 = arith.addf %49, %55 : vector<16x128xf32>
    %57 = vector.extract_strided_slice %26 {offsets = [0, 4], sizes = [16, 1], strides = [1, 1]} : vector<16x5xi32> to vector<16x1xi32>
    %58 = vector.broadcast %57 : vector<16x1xi32> to vector<16x128xi32>
    %59 = arith.cmpi eq, %27, %58 : vector<16x128xi32>
    %cst_26 = arith.constant 1.000000e+00 : f32
    %cst_27 = arith.constant 0.000000e+00 : f32
    %60 = vector.broadcast %cst_26 : f32 to vector<16x128xf32>
    %61 = vector.broadcast %cst_27 : f32 to vector<16x128xf32>
    %62 = arith.select %59, %60, %61 : vector<16x128xi1>, vector<16x128xf32>
    %63 = arith.addf %56, %62 : vector<16x128xf32>
    %64 = arith.truncf %63 : vector<16x128xf32> to vector<16x128xbf16>
    %c0_28 = arith.constant 0 : index
    %c0_29 = arith.constant 0 : index
    %65 = vector.load %arg6[%c0_28, %c0_29] : memref<128x128xbf16, #tpu.memory_space<vmem>>, vector<128x128xbf16>
    %cst_30 = arith.constant dense<0.000000e+00> : vector<16x128xf32>
    %66 = tpu.matmul %64, %65, %cst_30 {dimension_numbers = #tpu.dot_dimension_numbers<[1], [0], [0], [1], [0, 0, 1, 1], [], []>} : vector<16x128xbf16>, vector<128x128xbf16>, vector<16x128xf32> -> vector<16x128xf32>
    %cst_31 = arith.constant 2.000000e-01 : f32
    %67 = vector.broadcast %cst_31 : f32 to vector<16x128xf32>
    %68 = arith.mulf %66, %67 : vector<16x128xf32>
    %69 = arith.addf %25, %68 : vector<16x128xf32>
    %c0_32 = arith.constant 0 : index
    %c0_33 = arith.constant 0 : index
    %70 = vector.load %arg8[%c0_32, %c0_33] : memref<1x128xbf16, #tpu.memory_space<vmem>>, vector<1x128xbf16>
    %71 = arith.extf %70 : vector<1x128xbf16> to vector<1x128xf32>
    %72 = vector.broadcast %71 : vector<1x128xf32> to vector<16x128xf32>
    %73 = arith.addf %69, %72 : vector<16x128xf32>
    %cst_34 = arith.constant 0.000000e+00 : f32
    %74 = vector.broadcast %cst_34 : f32 to vector<16x128xf32>
    %75 = arith.maximumf %73, %74 : vector<16x128xf32>
    %76 = arith.truncf %75 : vector<16x128xf32> to vector<16x128xbf16>
    %c0_35 = arith.constant 0 : index
    %c0_36 = arith.constant 0 : index
    %77 = vector.load %arg9[%c0_35, %c0_36] : memref<128x128xbf16, #tpu.memory_space<vmem>>, vector<128x128xbf16>
    %cst_37 = arith.constant dense<0.000000e+00> : vector<16x128xf32>
    %78 = tpu.matmul %76, %77, %cst_37 {dimension_numbers = #tpu.dot_dimension_numbers<[1], [0], [0], [1], [0, 0, 1, 1], [], []>} : vector<16x128xbf16>, vector<128x128xbf16>, vector<16x128xf32> -> vector<16x128xf32>
    %c0_38 = arith.constant 0 : index
    %c0_39 = arith.constant 0 : index
    %79 = vector.load %arg10[%c0_38, %c0_39] : memref<1x128xf32, #tpu.memory_space<vmem>>, vector<1x128xf32>
    %80 = vector.broadcast %79 : vector<1x128xf32> to vector<16x128xf32>
    %81 = arith.addf %78, %80 : vector<16x128xf32>
    %c0_40 = arith.constant 0 : index
    %c0_41 = arith.constant 0 : index
    %82 = vector.load %arg11[%c0_40, %c0_41] : memref<16x128xf32, #tpu.memory_space<vmem>>, vector<16x128xf32>
    tpu.vector_store %arg11[%c0_40, %c0_41], %81 {strides = array<i32>} : memref<16x128xf32, #tpu.memory_space<vmem>>, vector<16x128xf32>,
    return
  }
  func.func @transform_0(%arg0: i32) -> (i32, i32) {
    %c0_i32 = arith.constant 0 : i32
    %c0_i32_0 = arith.constant 0 : i32
    return %arg0, %c0_i32 : i32, i32
  }
  func.func @transform_1(%arg0: i32) -> (i32, i32) {
    %c0_i32 = arith.constant 0 : i32
    %c0_i32_0 = arith.constant 0 : i32
    return %arg0, %c0_i32 : i32, i32
  }
  func.func @transform_2(%arg0: i32) -> (i32, i32) {
    %c0_i32 = arith.constant 0 : i32
    %c0_i32_0 = arith.constant 0 : i32
    return %arg0, %c0_i32 : i32, i32
  }
  func.func @transform_3(%arg0: i32) -> (i32, i32) {
    %c0_i32 = arith.constant 0 : i32
    %c0_i32_0 = arith.constant 0 : i32
    %c0_i32_1 = arith.constant 0 : i32
    return %c0_i32, %c0_i32_0 : i32, i32
  }
  func.func @transform_4(%arg0: i32) -> (i32, i32) {
    %c0_i32 = arith.constant 0 : i32
    %c0_i32_0 = arith.constant 0 : i32
    %c0_i32_1 = arith.constant 0 : i32
    return %c0_i32, %c0_i32_0 : i32, i32
  }
  func.func @transform_5(%arg0: i32) -> (i32, i32) {
    %c0_i32 = arith.constant 0 : i32
    %c0_i32_0 = arith.constant 0 : i32
    %c0_i32_1 = arith.constant 0 : i32
    return %c0_i32, %c0_i32_0 : i32, i32
  }
  func.func @transform_6(%arg0: i32) -> (i32, i32) {
    %c0_i32 = arith.constant 0 : i32
    %c0_i32_0 = arith.constant 0 : i32
    %c0_i32_1 = arith.constant 0 : i32
    return %c0_i32, %c0_i32_0 : i32, i32
  }
  func.func @transform_7(%arg0: i32) -> (i32, i32) {
    %c0_i32 = arith.constant 0 : i32
    %c0_i32_0 = arith.constant 0 : i32
    %c0_i32_1 = arith.constant 0 : i32
    return %c0_i32, %c0_i32_0 : i32, i32
  }
  func.func @transform_8(%arg0: i32) -> (i32, i32) {
    %c0_i32 = arith.constant 0 : i32
    %c0_i32_0 = arith.constant 0 : i32
    %c0_i32_1 = arith.constant 0 : i32
    return %c0_i32, %c0_i32_0 : i32, i32
  }
  func.func @transform_9(%arg0: i32) -> (i32, i32) {
    %c0_i32 = arith.constant 0 : i32
    %c0_i32_0 = arith.constant 0 : i32
    %c0_i32_1 = arith.constant 0 : i32
    return %c0_i32, %c0_i32_0 : i32, i32
  }
  func.func @transform_10(%arg0: i32) -> (i32, i32) {
    %c0_i32 = arith.constant 0 : i32
    %c0_i32_0 = arith.constant 0 : i32
    return %arg0, %c0_i32 : i32, i32
  }
}

module attributes {stable_mosaic.version = 11 : i64} {
  func.func @kernel(%arg0: i32, %arg1: memref<16x2xi32, #tpu.memory_space<vmem>>, %arg2: memref<16x5xi32, #tpu.memory_space<vmem>>, %arg3: memref<16x128xbf16, #tpu.memory_space<vmem>>, %arg4: memref<128x128xbf16, #tpu.memory_space<vmem>>, %arg5: memref<128x128xbf16, #tpu.memory_space<vmem>>, %arg6: memref<128x128xbf16, #tpu.memory_space<vmem>>, %arg7: memref<128x128xbf16, #tpu.memory_space<vmem>>, %arg8: memref<1x128xbf16, #tpu.memory_space<vmem>>, %arg9: memref<128x128xbf16, #tpu.memory_space<vmem>>, %arg10: memref<1x128xf32, #tpu.memory_space<vmem>>, %arg11: memref<16x128xf32, #tpu.memory_space<vmem>>) attributes {dimension_semantics = [#tpu.dimension_semantics<parallel>], iteration_bounds = array<i64: 1>, scalar_prefetch = 0 : i64, scratch_operands = 0 : i64, tpu.core_type = #tpu.core_type<tc>, window_params = [{transform_indices = @transform_0, window_bounds = array<i64: 16, 2>}, {transform_indices = @transform_1, window_bounds = array<i64: 16, 5>}, {transform_indices = @transform_2, window_bounds = array<i64: 16, 128>}, {pipeline_mode = #tpu.pipeline_mode<synchronous>, transform_indices = @transform_3, window_bounds = array<i64: 128, 128>}, {pipeline_mode = #tpu.pipeline_mode<synchronous>, transform_indices = @transform_4, window_bounds = array<i64: 128, 128>}, {pipeline_mode = #tpu.pipeline_mode<synchronous>, transform_indices = @transform_5, window_bounds = array<i64: 128, 128>}, {pipeline_mode = #tpu.pipeline_mode<synchronous>, transform_indices = @transform_6, window_bounds = array<i64: 128, 128>}, {pipeline_mode = #tpu.pipeline_mode<synchronous>, transform_indices = @transform_7, window_bounds = array<i64: 1, 128>}, {pipeline_mode = #tpu.pipeline_mode<synchronous>, transform_indices = @transform_8, window_bounds = array<i64: 128, 128>}, {pipeline_mode = #tpu.pipeline_mode<synchronous>, transform_indices = @transform_9, window_bounds = array<i64: 1, 128>}, {transform_indices = @transform_10, window_bounds = array<i64: 16, 128>}]} {
    %c0 = arith.constant 0 : index
    %c0_0 = arith.constant 0 : index
    %0 = vector.load %arg3[%c0, %c0_0] : memref<16x128xbf16, #tpu.memory_space<vmem>>, vector<16x128xbf16>
    %c0_1 = arith.constant 0 : index
    %c0_2 = arith.constant 0 : index
    %1 = vector.load %arg7[%c0_1, %c0_2] : memref<128x128xbf16, #tpu.memory_space<vmem>>, vector<128x128xbf16>
    %cst = arith.constant dense<0.000000e+00> : vector<16x128xf32>
    %2 = tpu.matmul %0, %1, %cst {dimension_numbers = #tpu.dot_dimension_numbers<[1], [0], [0], [1], [0, 0, 1, 1], [], []>} : vector<16x128xbf16>, vector<128x128xbf16>, vector<16x128xf32> -> vector<16x128xf32>
    %c0_3 = arith.constant 0 : index
    %c0_4 = arith.constant 0 : index
    %3 = vector.load %arg1[%c0_3, %c0_4] : memref<16x2xi32, #tpu.memory_space<vmem>>, vector<16x2xi32>
    %4 = tpu.iota {dimensions = array<i32: 1>} : vector<16x128xi32>
    %5 = vector.extract_strided_slice %3 {offsets = [0, 0], sizes = [16, 1], strides = [1, 1]} : vector<16x2xi32> to vector<16x1xi32>
    %6 = vector.broadcast %5 : vector<16x1xi32> to vector<16x128xi32>
    %7 = arith.cmpi eq, %4, %6 : vector<16x128xi32>
    %cst_5 = arith.constant 1.000000e+00 : f32
    %cst_6 = arith.constant 0.000000e+00 : f32
    %8 = vector.broadcast %cst_5 : f32 to vector<16x128xf32>
    %9 = vector.broadcast %cst_6 : f32 to vector<16x128xf32>
    %10 = arith.select %7, %8, %9 : vector<16x128xi1>, vector<16x128xf32>
    %11 = arith.truncf %10 : vector<16x128xf32> to vector<16x128xbf16>
    %c0_7 = arith.constant 0 : index
    %c0_8 = arith.constant 0 : index
    %12 = vector.load %arg4[%c0_7, %c0_8] : memref<128x128xbf16, #tpu.memory_space<vmem>>, vector<128x128xbf16>
    %cst_9 = arith.constant dense<0.000000e+00> : vector<16x128xf32>
    %13 = tpu.matmul %11, %12, %cst_9 {dimension_numbers = #tpu.dot_dimension_numbers<[1], [0], [0], [1], [0, 0, 1, 1], [], []>} : vector<16x128xbf16>, vector<128x128xbf16>, vector<16x128xf32> -> vector<16x128xf32>
    %14 = arith.addf %2, %13 : vector<16x128xf32>
    %15 = tpu.iota {dimensions = array<i32: 1>} : vector<16x128xi32>
    %16 = vector.extract_strided_slice %3 {offsets = [0, 1], sizes = [16, 1], strides = [1, 1]} : vector<16x2xi32> to vector<16x1xi32>
    %17 = vector.broadcast %16 : vector<16x1xi32> to vector<16x128xi32>
    %18 = arith.cmpi eq, %15, %17 : vector<16x128xi32>
    %cst_10 = arith.constant 1.000000e+00 : f32
    %cst_11 = arith.constant 0.000000e+00 : f32
    %19 = vector.broadcast %cst_10 : f32 to vector<16x128xf32>
    %20 = vector.broadcast %cst_11 : f32 to vector<16x128xf32>
    %21 = arith.select %18, %19, %20 : vector<16x128xi1>, vector<16x128xf32>
    %22 = arith.truncf %21 : vector<16x128xf32> to vector<16x128xbf16>
    %c0_12 = arith.constant 0 : index
    %c0_13 = arith.constant 0 : index
    %23 = vector.load %arg5[%c0_12, %c0_13] : memref<128x128xbf16, #tpu.memory_space<vmem>>, vector<128x128xbf16>
    %cst_14 = arith.constant dense<0.000000e+00> : vector<16x128xf32>
    %24 = tpu.matmul %22, %23, %cst_14 {dimension_numbers = #tpu.dot_dimension_numbers<[1], [0], [0], [1], [0, 0, 1, 1], [], []>} : vector<16x128xbf16>, vector<128x128xbf16>, vector<16x128xf32> -> vector<16x128xf32>
    %25 = arith.addf %14, %24 : vector<16x128xf32>
    %c0_15 = arith.constant 0 : index
    %c0_16 = arith.constant 0 : index
    %26 = vector.load %arg2[%c0_15, %c0_16] : memref<16x5xi32, #tpu.memory_space<vmem>>, vector<16x5xi32>
    %27 = tpu.iota {dimensions = array<i32: 1>} : vector<16x128xi32>
    %cst_17 = arith.constant 0.000000e+00 : f32
    %28 = vector.broadcast %cst_17 : f32 to vector<16x128xf32>
    %29 = vector.extract_strided_slice %26 {offsets = [0, 0], sizes = [16, 1], strides = [1, 1]} : vector<16x5xi32> to vector<16x1xi32>
    %30 = vector.broadcast %29 : vector<16x1xi32> to vector<16x128xi32>
    %31 = arith.cmpi eq, %27, %30 : vector<16x128xi32>
    %cst_18 = arith.constant 1.000000e+00 : f32
    %cst_19 = arith.constant 0.000000e+00 : f32
    %32 = vector.broadcast %cst_18 : f32 to vector<16x128xf32>
    %33 = vector.broadcast %cst_19 : f32 to vector<16x128xf32>
    %34 = arith.select %31, %32, %33 : vector<16x128xi1>, vector<16x128xf32>
    %35 = arith.addf %28, %34 : vector<16x128xf32>
    %36 = vector.extract_strided_slice %26 {offsets = [0, 1], sizes = [16, 1], strides = [1, 1]} : vector<16x5xi32> to vector<16x1xi32>
    %37 = vector.broadcast %36 : vector<16x1xi32> to vector<16x128xi32>
    %38 = arith.cmpi eq, %27, %37 : vector<16x128xi32>
    %cst_20 = arith.constant 1.000000e+00 : f32
    %cst_21 = arith.constant 0.000000e+00 : f32
    %39 = vector.broadcast %cst_20 : f32 to vector<16x128xf32>
    %40 = vector.broadcast %cst_21 : f32 to vector<16x128xf32>
    %41 = arith.select %38, %39, %40 : vector<16x128xi1>, vector<16x128xf32>
    %42 = arith.addf %35, %41 : vector<16x128xf32>
    %43 = vector.extract_strided_slice %26 {offsets = [0, 2], sizes = [16, 1], strides = [1, 1]} : vector<16x5xi32> to vector<16x1xi32>
    %44 = vector.broadcast %43 : vector<16x1xi32> to vector<16x128xi32>
    %45 = arith.cmpi eq, %27, %44 : vector<16x128xi32>
    %cst_22 = arith.constant 1.000000e+00 : f32
    %cst_23 = arith.constant 0.000000e+00 : f32
    %46 = vector.broadcast %cst_22 : f32 to vector<16x128xf32>
    %47 = vector.broadcast %cst_23 : f32 to vector<16x128xf32>
    %48 = arith.select %45, %46, %47 : vector<16x128xi1>, vector<16x128xf32>
    %49 = arith.addf %42, %48 : vector<16x128xf32>
    %50 = vector.extract_strided_slice %26 {offsets = [0, 3], sizes = [16, 1], strides = [1, 1]} : vector<16x5xi32> to vector<16x1xi32>
    %51 = vector.broadcast %50 : vector<16x1xi32> to vector<16x128xi32>
    %52 = arith.cmpi eq, %27, %51 : vector<16x128xi32>
    %cst_24 = arith.constant 1.000000e+00 : f32
    %cst_25 = arith.constant 0.000000e+00 : f32
    %53 = vector.broadcast %cst_24 : f32 to vector<16x128xf32>
    %54 = vector.broadcast %cst_25 : f32 to vector<16x128xf32>
    %55 = arith.select %52, %53, %54 : vector<16x128xi1>, vector<16x128xf32>
    %56 = arith.addf %49, %55 : vector<16x128xf32>
    %57 = vector.extract_strided_slice %26 {offsets = [0, 4], sizes = [16, 1], strides = [1, 1]} : vector<16x5xi32> to vector<16x1xi32>
    %58 = vector.broadcast %57 : vector<16x1xi32> to vector<16x128xi32>
    %59 = arith.cmpi eq, %27, %58 : vector<16x128xi32>
    %cst_26 = arith.constant 1.000000e+00 : f32
    %cst_27 = arith.constant 0.000000e+00 : f32
    %60 = vector.broadcast %cst_26 : f32 to vector<16x128xf32>
    %61 = vector.broadcast %cst_27 : f32 to vector<16x128xf32>
    %62 = arith.select %59, %60, %61 : vector<16x128xi1>, vector<16x128xf32>
    %63 = arith.addf %56, %62 : vector<16x128xf32>
    %64 = arith.truncf %63 : vector<16x128xf32> to vector<16x128xbf16>
    %c0_28 = arith.constant 0 : index
    %c0_29 = arith.constant 0 : index
    %65 = vector.load %arg6[%c0_28, %c0_29] : memref<128x128xbf16, #tpu.memory_space<vmem>>, vector<128x128xbf16>
    %cst_30 = arith.constant dense<0.000000e+00> : vector<16x128xf32>
    %66 = tpu.matmul %64, %65, %cst_30 {dimension_numbers = #tpu.dot_dimension_numbers<[1], [0], [0], [1], [0, 0, 1, 1], [], []>} : vector<16x128xbf16>, vector<128x128xbf16>, vector<16x128xf32> -> vector<16x128xf32>
    %cst_31 = arith.constant 2.000000e-01 : f32
    %67 = vector.broadcast %cst_31 : f32 to vector<16x128xf32>
    %68 = arith.mulf %66, %67 : vector<16x128xf32>
    %69 = arith.addf %25, %68 : vector<16x128xf32>
    %c0_32 = arith.constant 0 : index
    %c0_33 = arith.constant 0 : index
    %70 = vector.load %arg8[%c0_32, %c0_33] : memref<1x128xbf16, #tpu.memory_space<vmem>>, vector<1x128xbf16>
    %71 = arith.extf %70 : vector<1x128xbf16> to vector<1x128xf32>
    %72 = vector.broadcast %71 : vector<1x128xf32> to vector<16x128xf32>
    %73 = arith.addf %69, %72 : vector<16x128xf32>
    %cst_34 = arith.constant 0.000000e+00 : f32
    %74 = vector.broadcast %cst_34 : f32 to vector<16x128xf32>
    %75 = arith.maximumf %73, %74 : vector<16x128xf32>
    %76 = arith.truncf %75 : vector<16x128xf32> to vector<16x128xbf16>
    %c0_35 = arith.constant 0 : index
    %c0_36 = arith.constant 0 : index
    %77 = vector.load %arg9[%c0_35, %c0_36] : memref<128x128xbf16, #tpu.memory_space<vmem>>, vector<128x128xbf16>
    %cst_37 = arith.constant dense<0.000000e+00> : vector<16x128xf32>
    %78 = tpu.matmul %76, %77, %cst_37 {dimension_numbers = #tpu.dot_dimension_numbers<[1], [0], [0], [1], [0, 0, 1, 1], [], []>} : vector<16x128xbf16>, vector<128x128xbf16>, vector<16x128xf32> -> vector<16x128xf32>
    %c0_38 = arith.constant 0 : index
    %c0_39 = arith.constant 0 : index
    %79 = vector.load %arg10[%c0_38, %c0_39] : memref<1x128xf32, #tpu.memory_space<vmem>>, vector<1x128xf32>
    %80 = vector.broadcast %79 : vector<1x128xf32> to vector<16x128xf32>
    %81 = arith.addf %78, %80 : vector<16x128xf32>
    %c0_40 = arith.constant 0 : index
    %c0_41 = arith.constant 0 : index
    %82 = vector.load %arg11[%c0_40, %c0_41] : memref<16x128xf32, #tpu.memory_space<vmem>>, vector<16x128xf32>
    tpu.vector_store %arg11[%c0_40, %c0_41], %81 {strides = array<i32>} : memref<16x128xf32, #tpu.memory_space<vmem>>, vector<16x128xf32>,
    return
  }
  func.func @transform_0(%arg0: i32) -> (i32, i32) {
    %c0_i32 = arith.constant 0 : i32
    %c0_i32_0 = arith.constant 0 : i32
    return %arg0, %c0_i32 : i32, i32
  }
  func.func @transform_1(%arg0: i32) -> (i32, i32) {
    %c0_i32 = arith.constant 0 : i32
    %c0_i32_0 = arith.constant 0 : i32
    return %arg0, %c0_i32 : i32, i32
  }
  func.func @transform_2(%arg0: i32) -> (i32, i32) {
    %c0_i32 = arith.constant 0 : i32
    %c0_i32_0 = arith.constant 0 : i32
    return %arg0, %c0_i32 : i32, i32
  }
  func.func @transform_3(%arg0: i32) -> (i32, i32) {
    %c0_i32 = arith.constant 0 : i32
    %c0_i32_0 = arith.constant 0 : i32
    %c0_i32_1 = arith.constant 0 : i32
    return %c0_i32, %c0_i32_0 : i32, i32
  }
  func.func @transform_4(%arg0: i32) -> (i32, i32) {
    %c0_i32 = arith.constant 0 : i32
    %c0_i32_0 = arith.constant 0 : i32
    %c0_i32_1 = arith.constant 0 : i32
    return %c0_i32, %c0_i32_0 : i32, i32
  }
  func.func @transform_5(%arg0: i32) -> (i32, i32) {
    %c0_i32 = arith.constant 0 : i32
    %c0_i32_0 = arith.constant 0 : i32
    %c0_i32_1 = arith.constant 0 : i32
    return %c0_i32, %c0_i32_0 : i32, i32
  }
  func.func @transform_6(%arg0: i32) -> (i32, i32) {
    %c0_i32 = arith.constant 0 : i32
    %c0_i32_0 = arith.constant 0 : i32
    %c0_i32_1 = arith.constant 0 : i32
    return %c0_i32, %c0_i32_0 : i32, i32
  }
  func.func @transform_7(%arg0: i32) -> (i32, i32) {
    %c0_i32 = arith.constant 0 : i32
    %c0_i32_0 = arith.constant 0 : i32
    %c0_i32_1 = arith.constant 0 : i32
    return %c0_i32, %c0_i32_0 : i32, i32
  }
  func.func @transform_8(%arg0: i32) -> (i32, i32) {
    %c0_i32 = arith.constant 0 : i32
    %c0_i32_0 = arith.constant 0 : i32
    %c0_i32_1 = arith.constant 0 : i32
    return %c0_i32, %c0_i32_0 : i32, i32
  }
  func.func @transform_9(%arg0: i32) -> (i32, i32) {
    %c0_i32 = arith.constant 0 : i32
    %c0_i32_0 = arith.constant 0 : i32
    %c0_i32_1 = arith.constant 0 : i32
    return %c0_i32, %c0_i32_0 : i32, i32
  }
  func.func @transform_10(%arg0: i32) -> (i32, i32) {
    %c0_i32 = arith.constant 0 : i32
    %c0_i32_0 = arith.constant 0 : i32
    return %arg0, %c0_i32 : i32, i32
  }
}

</mosaic_0001>

<llo_original>
// kernel: tpu_custom_call.1
$region0: #{tpu_custom_call.1}
  #allocation0 [shape = 'u32[]', space=smem, size = 0x4, offset = 0x4, fixed_abs, tag = 'smem constant byte address 0x4 - core index']
  #allocation1 [shape = 'u32[144,128]{1,0:T(1,128)}', space=vmem, size = 0x12000, scoped, tag = 'internal scratch']
  %s0 = inlined_call_operand.vmem [shape: s32[16,2], index: 0, kind: input, shape index: {}]
  %s1 = inlined_call_operand.vmem [shape: s32[16,5], index: 1, kind: input, shape index: {}]
  %s2 = inlined_call_operand.hbm [shape: bf16[16,128], index: 2, kind: input, shape index: {}]
  %s3 = inlined_call_operand.hbm [shape: bf16[128,128], index: 3, kind: input, shape index: {}]
  %s4 = inlined_call_operand.hbm [shape: bf16[128,128], index: 4, kind: input, shape index: {}]
  %s5 = inlined_call_operand.hbm [shape: bf16[128,128], index: 5, kind: input, shape index: {}]
  %s6 = inlined_call_operand.vmem [shape: bf16[128,128], index: 6, kind: input, shape index: {}]
  %s7 = inlined_call_operand.vmem [shape: bf16[1,128], index: 7, kind: input, shape index: {}]
  %s8 = inlined_call_operand.hbm [shape: bf16[128,128], index: 8, kind: input, shape index: {}]
  %s9 = inlined_call_operand.vmem [shape: f32[1,128], index: 9, kind: input, shape index: {}]
  %s10 = inlined_call_operand.hbm [shape: f32[16,128], index: 10, kind: output, shape index: {}]
  %s11 = sld [smem:[#allocation0]]
  $region70: #{tpu_custom_call.1} parent=0
    _
  %s13 = ssub.s32 1, %s11
  %s14 = scalar_select 0, %s13, %s11
  $region1: #{tpu_custom_call.1} parent=0
    #allocation2 [shape = 'u8[4096]{0}', space=vmem, size = 0x1000, scoped, tag = 'input window, operand 2, single buffered']
    #allocation3 [shape = 's32[1]{0}', space=sflag, size = 0x4, scoped, tag = 'scoped memory for tpu_custom_call.1']
    #allocation4 [shape = 's32[1]{0}', space=sflag, size = 0x4, scoped, tag = 'scoped memory for tpu_custom_call.1']
    #allocation5 [shape = 'u8[32768]{0}', space=vmem, size = 0x8000, scoped, tag = 'input window, operand 3, single buffered']
    #allocation6 [shape = 's32[1]{0}', space=sflag, size = 0x4, scoped, tag = 'scoped memory for tpu_custom_call.1']
    #allocation7 [shape = 'u8[32768]{0}', space=vmem, size = 0x8000, scoped, tag = 'input window, operand 4, single buffered']
    #allocation8 [shape = 'u8[32768]{0}', space=vmem, size = 0x8000, scoped, tag = 'input window, operand 5, single buffered']
    #allocation9 [shape = 's32[1]{0}', space=sflag, size = 0x4, scoped, tag = 'scoped memory for tpu_custom_call.1']
    #allocation10 [shape = 'u8[32768]{0}', space=vmem, size = 0x8000, scoped, tag = 'input window, operand 8, single buffered']
    #allocation11 [shape = 'u8[8192]{0}', space=vmem, size = 0x2000, scoped, tag = 'output window, operand 0, single buffered']
    %15 = vsyncpa [#allocation3], 0
    %16 = vsyncpa [#allocation6], 0
    %17 = vsyncpa [#allocation9], 0
    %18 = vsyncpa [#allocation4], 0
    // Predicated region
    $region2: #{tpu_custom_call.1} parent=1 // pred_check
      _
    $region3: #{tpu_custom_call.1} parent=1 // pred_check_branch
      %20 = sbr.rel (0) target = $region5
    $region4: #{tpu_custom_call.1} parent=1 // pred_region
      _
    $region5: #{tpu_custom_call.1} parent=1 // pred_fallthru
      _
    // Predicated region
    $region6: #{tpu_custom_call.1} parent=1 // pred_check
      _
    $region7: #{tpu_custom_call.1} parent=1 // pred_check_branch
      %22 = sbr.rel (0) target = $region9
    $region8: #{tpu_custom_call.1} parent=1 // pred_region
      _
    $region9: #{tpu_custom_call.1} parent=1 // pred_fallthru
      _
    // Predicated region
    $region10: #{tpu_custom_call.1} parent=1 // pred_check
      _
    $region11: #{tpu_custom_call.1} parent=1 // pred_check_branch
      %24 = sbr.rel (0) target = $region13
    $region12: #{tpu_custom_call.1} parent=1 // pred_region
      %s26 = ssub.s32 128, 128
      %27 = vsyncadd [#allocation3], %s26
      %s28 = sshll.u32 [#allocation2], 4
      %s29 = int_to_ptr.vmem [resolvable:$true] %s28
      %34 = dma.hbm_to_vmem [thread:$0]  %s2, 128, %s29, [#allocation3], 64, 64, 4
    $region13: #{tpu_custom_call.1} parent=1 // pred_fallthru
      _
    // Predicated region
    $region14: #{tpu_custom_call.1} parent=1 // pred_check
      _
    $region15: #{tpu_custom_call.1} parent=1 // pred_check_branch
      %36 = sbr.rel (0) target = $region17
    $region16: #{tpu_custom_call.1} parent=1 // pred_region
      %s38 = ssub.s32 1024, 1024
      %39 = vsyncadd [#allocation6], %s38
      %s40 = sshll.u32 [#allocation5], 4
      %s41 = int_to_ptr.vmem [resolvable:$true] %s40
      %46 = dma.hbm_to_vmem [thread:$0]  %s3, 1024, %s41, [#allocation6], 64, 64, 4
    $region17: #{tpu_custom_call.1} parent=1 // pred_fallthru
      _
    // Predicated region
    $region18: #{tpu_custom_call.1} parent=1 // pred_check
      _
    $region19: #{tpu_custom_call.1} parent=1 // pred_check_branch
      %48 = sbr.rel (0) target = $region21
    $region20: #{tpu_custom_call.1} parent=1 // pred_region
      %s50 = ssub.s32 1024, 1024
      %51 = vsyncadd [#allocation6], %s50
      %s52 = sshll.u32 [#allocation7], 4
      %s53 = int_to_ptr.vmem [resolvable:$true] %s52
      %58 = dma.hbm_to_vmem [thread:$0]  %s4, 1024, %s53, [#allocation6], 64, 64, 4
    $region21: #{tpu_custom_call.1} parent=1 // pred_fallthru
      _
    // Predicated region
    $region22: #{tpu_custom_call.1} parent=1 // pred_check
      _
    $region23: #{tpu_custom_call.1} parent=1 // pred_check_branch
      %60 = sbr.rel (0) target = $region25
    $region24: #{tpu_custom_call.1} parent=1 // pred_region
      %s62 = ssub.s32 1024, 1024
      %63 = vsyncadd [#allocation9], %s62
      %s64 = sshll.u32 [#allocation8], 4
      %s65 = int_to_ptr.vmem [resolvable:$true] %s64
      %70 = dma.hbm_to_vmem [thread:$0]  %s5, 1024, %s65, [#allocation9], 64, 64, 4
    $region25: #{tpu_custom_call.1} parent=1 // pred_fallthru
      _
    // Predicated region
    $region26: #{tpu_custom_call.1} parent=1 // pred_check
      _
    $region27: #{tpu_custom_call.1} parent=1 // pred_check_branch
      %72 = sbr.rel (0) target = $region29
    $region28: #{tpu_custom_call.1} parent=1 // pred_region
      _
    $region29: #{tpu_custom_call.1} parent=1 // pred_fallthru
      _
    // Predicated region
    $region30: #{tpu_custom_call.1} parent=1 // pred_check
      _
    $region31: #{tpu_custom_call.1} parent=1 // pred_check_branch
      %74 = sbr.rel (0) target = $region33
    $region32: #{tpu_custom_call.1} parent=1 // pred_region
      _
    $region33: #{tpu_custom_call.1} parent=1 // pred_fallthru
      _
    // Predicated region
    $region34: #{tpu_custom_call.1} parent=1 // pred_check
      _
    $region35: #{tpu_custom_call.1} parent=1 // pred_check_branch
      %76 = sbr.rel (0) target = $region37
    $region36: #{tpu_custom_call.1} parent=1 // pred_region
      %s78 = ssub.s32 1024, 1024
      %79 = vsyncadd [#allocation9], %s78
      %s80 = sshll.u32 [#allocation10], 4
      %s81 = int_to_ptr.vmem [resolvable:$true] %s80
      %86 = dma.hbm_to_vmem [thread:$0]  %s8, 1024, %s81, [#allocation9], 64, 64, 4
    $region37: #{tpu_custom_call.1} parent=1 // pred_fallthru
      _
    // Predicated region
    $region38: #{tpu_custom_call.1} parent=1 // pred_check
      _
    $region39: #{tpu_custom_call.1} parent=1 // pred_check_branch
      %88 = sbr.rel (0) target = $region41
    $region40: #{tpu_custom_call.1} parent=1 // pred_region
      _
    $region41: #{tpu_custom_call.1} parent=1 // pred_fallthru
      _
    // Predicated region
    $region42: #{tpu_custom_call.1} parent=1 // pred_check
      _
    $region43: #{tpu_custom_call.1} parent=1 // pred_check_branch
      %90 = sbr.rel (0) target = $region45
    $region44: #{tpu_custom_call.1} parent=1 // pred_region
      %91 = dma.done [#allocation3], 128
    $region45: #{tpu_custom_call.1} parent=1 // pred_fallthru
      _
    // Predicated region
    $region46: #{tpu_custom_call.1} parent=1 // pred_check
      _
    $region47: #{tpu_custom_call.1} parent=1 // pred_check_branch
      %93 = sbr.rel (0) target = $region49
    $region48: #{tpu_custom_call.1} parent=1 // pred_region
      %94 = dma.done [#allocation6], 1024
    $region49: #{tpu_custom_call.1} parent=1 // pred_fallthru
      _
    // Predicated region
    $region50: #{tpu_custom_call.1} parent=1 // pred_check
      _
    $region51: #{tpu_custom_call.1} parent=1 // pred_check_branch
      %96 = sbr.rel (0) target = $region53
    $region52: #{tpu_custom_call.1} parent=1 // pred_region
      %97 = dma.done [#allocation6], 1024
    $region53: #{tpu_custom_call.1} parent=1 // pred_fallthru
      _
    // Predicated region
    $region54: #{tpu_custom_call.1} parent=1 // pred_check
      _
    $region55: #{tpu_custom_call.1} parent=1 // pred_check_branch
      %99 = sbr.rel (0) target = $region57
    $region56: #{tpu_custom_call.1} parent=1 // pred_region
      %100 = dma.done [#allocation9], 1024
    $region57: #{tpu_custom_call.1} parent=1 // pred_fallthru
      _
    // Predicated region
    $region58: #{tpu_custom_call.1} parent=1 // pred_check
      _
    $region59: #{tpu_custom_call.1} parent=1 // pred_check_branch
      %102 = sbr.rel (0) target = $region61
    $region60: #{tpu_custom_call.1} parent=1 // pred_region
      %103 = dma.done [#allocation9], 1024
    $region61: #{tpu_custom_call.1} parent=1 // pred_fallthru
      _
    %v105 = vld [vmem:[#allocation2] sm:$0xf]
    %v106 = vld [vmem:[#allocation2 + $0x4] sm:$0xf]
    %v107 = vld [vmem:[%s6] sm:$0xf]
    %v108 = vld [vmem:[%s6 + $0x4] sm:$0xf]
    %v109 = vld [vmem:[%s6 + $0x8] sm:$0xf]
    %v110 = vld [vmem:[%s6 + $0xc] sm:$0xf]
    %v111 = vld [vmem:[%s6 + $0x10] sm:$0xf]
    %v112 = vld [vmem:[%s6 + $0x14] sm:$0xf]
    %v113 = vld [vmem:[%s6 + $0x18] sm:$0xf]
    %v114 = vld [vmem:[%s6 + $0x1c] sm:$0xf]
    %v115 = vld [vmem:[%s6 + $0x20] sm:$0xf]
    %v116 = vld [vmem:[%s6 + $0x24] sm:$0xf]
    %v117 = vld [vmem:[%s6 + $0x28] sm:$0xf]
    %v118 = vld [vmem:[%s6 + $0x2c] sm:$0xf]
    %v119 = vld [vmem:[%s6 + $0x30] sm:$0xf]
    %v120 = vld [vmem:[%s6 + $0x34] sm:$0xf]
    %v121 = vld [vmem:[%s6 + $0x38] sm:$0xf]
    %v122 = vld [vmem:[%s6 + $0x3c] sm:$0xf]
    %v123 = vld [vmem:[%s0] sm:$0xff]
    %v124 = vld [vmem:[%s0 + $0x8] sm:$0xff]
    %v125 = vlaneseq
    %v126 = vand.u32 %v125, 127
    %127 = vset.pattern.permute.xlu0 0
    %128 = vperm.xlu0 %127, %v123
    %v129 = vpop.permute.xlu0 %128
    %130 = vset.pattern.permute.xlu0 0
    %131 = vperm.xlu0 %130, %v124
    %v132 = vpop.permute.xlu0 %131
    %vm133 = vcmp.eq.s32.totalorder %v126, %v129
    %vm134 = vcmp.eq.s32.totalorder %v126, %v132
    %v135 = vsel %vm133, 1.0, 0.0
    %v136 = vsel %vm134, 1.0, 0.0
    %v137 = vpack.c.bf16 %v136, %v135
    %v138 = vld [vmem:[#allocation5] sm:$0xf]
    %v139 = vld [vmem:[#allocation5 + $0x4] sm:$0xf]
    %v140 = vld [vmem:[#allocation5 + $0x8] sm:$0xf]
    %v141 = vld [vmem:[#allocation5 + $0xc] sm:$0xf]
    %v142 = vld [vmem:[#allocation5 + $0x10] sm:$0xf]
    %v143 = vld [vmem:[#allocation5 + $0x14] sm:$0xf]
    %v144 = vld [vmem:[#allocation5 + $0x18] sm:$0xf]
    %v145 = vld [vmem:[#allocation5 + $0x1c] sm:$0xf]
    %v146 = vld [vmem:[#allocation5 + $0x20] sm:$0xf]
    %v147 = vld [vmem:[#allocation5 + $0x24] sm:$0xf]
    %v148 = vld [vmem:[#allocation5 + $0x28] sm:$0xf]
    %v149 = vld [vmem:[#allocation5 + $0x2c] sm:$0xf]
    %v150 = vld [vmem:[#allocation5 + $0x30] sm:$0xf]
    %v151 = vld [vmem:[#allocation5 + $0x34] sm:$0xf]
    %v152 = vld [vmem:[#allocation5 + $0x38] sm:$0xf]
    %v153 = vld [vmem:[#allocation5 + $0x3c] sm:$0xf]
    %v170 = vunpack.c.l.b16 %v138
    %v171 = vunpack.c.l.b16 %v139
    %v172 = vunpack.c.l.b16 %v140
    %v173 = vunpack.c.l.b16 %v141
    %v174 = vunpack.c.l.b16 %v142
    %v175 = vunpack.c.l.b16 %v143
    %v176 = vunpack.c.l.b16 %v144
    %v177 = vunpack.c.l.b16 %v145
    %v178 = vunpack.c.l.b16 %v146
    %v179 = vunpack.c.l.b16 %v147
    %v180 = vunpack.c.l.b16 %v148
    %v181 = vunpack.c.l.b16 %v149
    %v182 = vunpack.c.l.b16 %v150
    %v183 = vunpack.c.l.b16 %v151
    %v184 = vunpack.c.l.b16 %v152
    %v185 = vunpack.c.l.b16 %v153
    %v186 = vpack.c.b16 %v171, %v170
    %v187 = vpack.c.b16 %v173, %v172
    %v188 = vpack.c.b16 %v175, %v174
    %v189 = vpack.c.b16 %v177, %v176
    %v190 = vpack.c.b16 %v179, %v178
    %v191 = vpack.c.b16 %v181, %v180
    %v192 = vpack.c.b16 %v183, %v182
    %v193 = vpack.c.b16 %v185, %v184
    %202 = vmatprep.subr.bf16.mxu0 0
    %203 = vmatpush1.bf16.msra.mxu0 %v186
    %204 = vmatprep.subr.bf16.mxu0 0
    %205 = vmatpush1.bf16.msra.mxu0 %v187
    %206 = vmatprep.subr.bf16.mxu0 0
    %207 = vmatpush1.bf16.msra.mxu0 %v188
    %208 = vmatprep.subr.bf16.mxu0 0
    %209 = vmatpush1.bf16.msra.mxu0 %v189
    %210 = vmatprep.subr.bf16.mxu0 0
    %211 = vmatpush1.bf16.msra.mxu0 %v190
    %212 = vmatprep.subr.bf16.mxu0 0
    %213 = vmatpush1.bf16.msra.mxu0 %v191
    %214 = vmatprep.subr.bf16.mxu0 0
    %215 = vmatpush1.bf16.msra.mxu0 %v192
    %216 = vmatprep.subr.bf16.mxu0 0
    %217 = vmatpush1.bf16.msra.mxu0 %v193
    %218 = vmatprep.subr.bf16.mxu0 0
    %219 = vmatpush1.bf16.msra.mxu0 0
    %220 = vmatprep.subr.bf16.mxu0 0
    %221 = vmatpush1.bf16.msra.mxu0 0
    %222 = vmatprep.subr.bf16.mxu0 0
    %223 = vmatpush1.bf16.msra.mxu0 0
    %224 = vmatprep.subr.bf16.mxu0 0
    %225 = vmatpush1.bf16.msra.mxu0 0
    %226 = vmatprep.subr.bf16.mxu0 0
    %227 = vmatpush1.bf16.msra.mxu0 0
    %228 = vmatprep.subr.bf16.mxu0 0
    %229 = vmatpush1.bf16.msra.mxu0 0
    %230 = vmatprep.subr.bf16.mxu0 0
    %231 = vmatpush1.bf16.msra.mxu0 0
    %232 = vmatprep.subr.bf16.mxu0 0
    %233 = vmatpush1.bf16.msra.mxu0 0
    %234 = vmatprep.mubr.bf16.mxu0 0
    %235 = vmatmul.mubr.bf16.gmra.mrb[0].mxu0 %v137
    %v236 = vpop.f32.mrb[0].mxu0
    %v237 = vadd.f32 0.0, %v236
    %v238 = vpop.f32.mrb[0].mxu0
    %v239 = vpop.f32.mrb[0].mxu0
    %v240 = vadd.f32 0.0, %v239
    %v241 = vpop.f32.mrb[0].mxu0
    %242 = vdwg.mxu0
    %v245 = vunpack.c.l.b16 %v105
    %v246 = vunpack.c.l.b16 %v106
    %v247 = vpack.c.b16 %v246, %v245
    %v265 = vunpack.c.l.b16 %v107
    %v266 = vunpack.c.l.b16 %v108
    %v267 = vunpack.c.l.b16 %v109
    %v268 = vunpack.c.l.b16 %v110
    %v269 = vunpack.c.l.b16 %v111
    %v270 = vunpack.c.l.b16 %v112
    %v271 = vunpack.c.l.b16 %v113
    %v272 = vunpack.c.l.b16 %v114
    %v273 = vunpack.c.l.b16 %v115
    %v274 = vunpack.c.l.b16 %v116
    %v275 = vunpack.c.l.b16 %v117
    %v276 = vunpack.c.l.b16 %v118
    %v277 = vunpack.c.l.b16 %v119
    %v278 = vunpack.c.l.b16 %v120
    %v279 = vunpack.c.l.b16 %v121
    %v280 = vunpack.c.l.b16 %v122
    %v281 = vpack.c.b16 %v266, %v265
    %v282 = vpack.c.b16 %v268, %v267
    %v283 = vpack.c.b16 %v270, %v269
    %v284 = vpack.c.b16 %v272, %v271
    %v285 = vpack.c.b16 %v274, %v273
    %v286 = vpack.c.b16 %v276, %v275
    %v287 = vpack.c.b16 %v278, %v277
    %v288 = vpack.c.b16 %v280, %v279
    %297 = vmatprep.subr.bf16.mxu0 0
    %298 = vmatpush1.bf16.msra.mxu0 %v281
    %299 = vmatprep.subr.bf16.mxu0 0
    %300 = vmatpush1.bf16.msra.mxu0 %v282
    %301 = vmatprep.subr.bf16.mxu0 0
    %302 = vmatpush1.bf16.msra.mxu0 %v283
    %303 = vmatprep.subr.bf16.mxu0 0
    %304 = vmatpush1.bf16.msra.mxu0 %v284
    %305 = vmatprep.subr.bf16.mxu0 0
    %306 = vmatpush1.bf16.msra.mxu0 %v285
    %307 = vmatprep.subr.bf16.mxu0 0
    %308 = vmatpush1.bf16.msra.mxu0 %v286
    %309 = vmatprep.subr.bf16.mxu0 0
    %310 = vmatpush1.bf16.msra.mxu0 %v287
    %311 = vmatprep.subr.bf16.mxu0 0
    %312 = vmatpush1.bf16.msra.mxu0 %v288
    %313 = vmatprep.subr.bf16.mxu0 0
    %314 = vmatpush1.bf16.msra.mxu0 0
    %315 = vmatprep.subr.bf16.mxu0 0
    %316 = vmatpush1.bf16.msra.mxu0 0
    %317 = vmatprep.subr.bf16.mxu0 0
    %318 = vmatpush1.bf16.msra.mxu0 0
    %319 = vmatprep.subr.bf16.mxu0 0
    %320 = vmatpush1.bf16.msra.mxu0 0
    %321 = vmatprep.subr.bf16.mxu0 0
    %322 = vmatpush1.bf16.msra.mxu0 0
    %323 = vmatprep.subr.bf16.mxu0 0
    %324 = vmatpush1.bf16.msra.mxu0 0
    %325 = vmatprep.subr.bf16.mxu0 0
    %326 = vmatpush1.bf16.msra.mxu0 0
    %327 = vmatprep.subr.bf16.mxu0 0
    %328 = vmatpush1.bf16.msra.mxu0 0
    %329 = vmatprep.mubr.bf16.mxu0 0
    %330 = vmatmul.mubr.bf16.gmra.mrb[0].mxu0 %v247
    %v331 = vpop.f32.mrb[0].mxu0
    %v332 = vadd.f32 %v237, %v331
    %v333 = vpop.f32.mrb[0].mxu0
    %v334 = vpop.f32.mrb[0].mxu0
    %v335 = vadd.f32 %v240, %v334
    %v336 = vpop.f32.mrb[0].mxu0
    %337 = vdwg.mxu0
    %338 = vset.pattern.permute.xlu0 1
    %339 = vperm.xlu0 %338, %v123
    %v340 = vpop.permute.xlu0 %339
    %341 = vset.pattern.permute.xlu0 1
    %342 = vperm.xlu0 %341, %v124
    %v343 = vpop.permute.xlu0 %342
    %vm344 = vcmp.eq.s32.totalorder %v126, %v340
    %vm345 = vcmp.eq.s32.totalorder %v126, %v343
    %v346 = vsel %vm344, 1.0, 0.0
    %v347 = vsel %vm345, 1.0, 0.0
    %v348 = vpack.c.bf16 %v347, %v346
    %v349 = vld [vmem:[#allocation7] sm:$0xf]
    %v350 = vld [vmem:[#allocation7 + $0x4] sm:$0xf]
    %v351 = vld [vmem:[#allocation7 + $0x8] sm:$0xf]
    %v352 = vld [vmem:[#allocation7 + $0xc] sm:$0xf]
    %v353 = vld [vmem:[#allocation7 + $0x10] sm:$0xf]
    %v354 = vld [vmem:[#allocation7 + $0x14] sm:$0xf]
    %v355 = vld [vmem:[#allocation7 + $0x18] sm:$0xf]
    %v356 = vld [vmem:[#allocation7 + $0x1c] sm:$0xf]
    %v357 = vld [vmem:[#allocation7 + $0x20] sm:$0xf]
    %v358 = vld [vmem:[#allocation7 + $0x24] sm:$0xf]
    %v359 = vld [vmem:[#allocation7 + $0x28] sm:$0xf]
    %v360 = vld [vmem:[#allocation7 + $0x2c] sm:$0xf]
    %v361 = vld [vmem:[#allocation7 + $0x30] sm:$0xf]
    %v362 = vld [vmem:[#allocation7 + $0x34] sm:$0xf]
    %v363 = vld [vmem:[#allocation7 + $0x38] sm:$0xf]
    %v364 = vld [vmem:[#allocation7 + $0x3c] sm:$0xf]
    %v381 = vunpack.c.l.b16 %v349
    %v382 = vunpack.c.l.b16 %v350
    %v383 = vunpack.c.l.b16 %v351
    %v384 = vunpack.c.l.b16 %v352
    %v385 = vunpack.c.l.b16 %v353
    %v386 = vunpack.c.l.b16 %v354
    %v387 = vunpack.c.l.b16 %v355
    %v388 = vunpack.c.l.b16 %v356
    %v389 = vunpack.c.l.b16 %v357
    %v390 = vunpack.c.l.b16 %v358
    %v391 = vunpack.c.l.b16 %v359
    %v392 = vunpack.c.l.b16 %v360
    %v393 = vunpack.c.l.b16 %v361
    %v394 = vunpack.c.l.b16 %v362
    %v395 = vunpack.c.l.b16 %v363
    %v396 = vunpack.c.l.b16 %v364
    %v397 = vpack.c.b16 %v382, %v381
    %v398 = vpack.c.b16 %v384, %v383
    %v399 = vpack.c.b16 %v386, %v385
    %v400 = vpack.c.b16 %v388, %v387
    %v401 = vpack.c.b16 %v390, %v389
    %v402 = vpack.c.b16 %v392, %v391
    %v403 = vpack.c.b16 %v394, %v393
    %v404 = vpack.c.b16 %v396, %v395
    %413 = vmatprep.subr.bf16.mxu0 0
    %414 = vmatpush1.bf16.msra.mxu0 %v397
    %415 = vmatprep.subr.bf16.mxu0 0
    %416 = vmatpush1.bf16.msra.mxu0 %v398
    %417 = vmatprep.subr.bf16.mxu0 0
    %418 = vmatpush1.bf16.msra.mxu0 %v399
    %419 = vmatprep.subr.bf16.mxu0 0
    %420 = vmatpush1.bf16.msra.mxu0 %v400
    %421 = vmatprep.subr.bf16.mxu0 0
    %422 = vmatpush1.bf16.msra.mxu0 %v401
    %423 = vmatprep.subr.bf16.mxu0 0
    %424 = vmatpush1.bf16.msra.mxu0 %v402
    %425 = vmatprep.subr.bf16.mxu0 0
    %426 = vmatpush1.bf16.msra.mxu0 %v403
    %427 = vmatprep.subr.bf16.mxu0 0
    %428 = vmatpush1.bf16.msra.mxu0 %v404
    %429 = vmatprep.subr.bf16.mxu0 0
    %430 = vmatpush1.bf16.msra.mxu0 0
    %431 = vmatprep.subr.bf16.mxu0 0
    %432 = vmatpush1.bf16.msra.mxu0 0
    %433 = vmatprep.subr.bf16.mxu0 0
    %434 = vmatpush1.bf16.msra.mxu0 0
    %435 = vmatprep.subr.bf16.mxu0 0
    %436 = vmatpush1.bf16.msra.mxu0 0
    %437 = vmatprep.subr.bf16.mxu0 0
    %438 = vmatpush1.bf16.msra.mxu0 0
    %439 = vmatprep.subr.bf16.mxu0 0
    %440 = vmatpush1.bf16.msra.mxu0 0
    %441 = vmatprep.subr.bf16.mxu0 0
    %442 = vmatpush1.bf16.msra.mxu0 0
    %443 = vmatprep.subr.bf16.mxu0 0
    %444 = vmatpush1.bf16.msra.mxu0 0
    %445 = vmatprep.mubr.bf16.mxu0 0
    %446 = vmatmul.mubr.bf16.gmra.mrb[0].mxu0 %v348
    %v447 = vpop.f32.mrb[0].mxu0
    %v448 = vadd.f32 0.0, %v447
    %v449 = vpop.f32.mrb[0].mxu0
    %v450 = vpop.f32.mrb[0].mxu0
    %v451 = vadd.f32 0.0, %v450
    %v452 = vpop.f32.mrb[0].mxu0
    %453 = vdwg.mxu0
    %v454 = vadd.f32 %v332, %v448
    %v455 = vadd.f32 %v335, %v451
    %v456 = vld [vmem:[%s1] sm:$0xff]
    %v457 = vld [vmem:[%s1 + $0x8] sm:$0xff]
    %458 = vset.pattern.permute.xlu0 0
    %459 = vperm.xlu0 %458, %v456
    %v460 = vpop.permute.xlu0 %459
    %461 = vset.pattern.permute.xlu0 0
    %462 = vperm.xlu0 %461, %v457
    %v463 = vpop.permute.xlu0 %462
    %vm464 = vcmp.eq.s32.totalorder %v126, %v460
    %vm465 = vcmp.eq.s32.totalorder %v126, %v463
    %v466 = vsel %vm464, 1.0, 0.0
    %v467 = vsel %vm465, 1.0, 0.0
    %v468 = vadd.f32 %v466, 0.0
    %v469 = vadd.f32 %v467, 0.0
    %470 = vset.pattern.permute.xlu0 1
    %471 = vperm.xlu0 %470, %v456
    %v472 = vpop.permute.xlu0 %471
    %473 = vset.pattern.permute.xlu0 1
    %474 = vperm.xlu0 %473, %v457
    %v475 = vpop.permute.xlu0 %474
    %vm476 = vcmp.eq.s32.totalorder %v126, %v472
    %vm477 = vcmp.eq.s32.totalorder %v126, %v475
    %v478 = vsel %vm476, 1.0, 0.0
    %v479 = vsel %vm477, 1.0, 0.0
    %v480 = vadd.f32 %v468, %v478
    %v481 = vadd.f32 %v469, %v479
    %482 = vset.pattern.permute.xlu0 2
    %483 = vperm.xlu0 %482, %v456
    %v484 = vpop.permute.xlu0 %483
    %485 = vset.pattern.permute.xlu0 2
    %486 = vperm.xlu0 %485, %v457
    %v487 = vpop.permute.xlu0 %486
    %vm488 = vcmp.eq.s32.totalorder %v126, %v484
    %vm489 = vcmp.eq.s32.totalorder %v126, %v487
    %v490 = vsel %vm488, 1.0, 0.0
    %v491 = vsel %vm489, 1.0, 0.0
    %v492 = vadd.f32 %v480, %v490
    %v493 = vadd.f32 %v481, %v491
    %494 = vset.pattern.permute.xlu0 3
    %495 = vperm.xlu0 %494, %v456
    %v496 = vpop.permute.xlu0 %495
    %497 = vset.pattern.permute.xlu0 3
    %498 = vperm.xlu0 %497, %v457
    %v499 = vpop.permute.xlu0 %498
    %vm500 = vcmp.eq.s32.totalorder %v126, %v496
    %vm501 = vcmp.eq.s32.totalorder %v126, %v499
    %v502 = vsel %vm500, 1.0, 0.0
    %v503 = vsel %vm501, 1.0, 0.0
    %v504 = vadd.f32 %v492, %v502
    %v505 = vadd.f32 %v493, %v503
    %506 = vset.pattern.permute.xlu0 4
    %507 = vperm.xlu0 %506, %v456
    %v508 = vpop.permute.xlu0 %507
    %509 = vset.pattern.permute.xlu0 4
    %510 = vperm.xlu0 %509, %v457
    %v511 = vpop.permute.xlu0 %510
    %vm512 = vcmp.eq.s32.totalorder %v126, %v508
    %vm513 = vcmp.eq.s32.totalorder %v126, %v511
    %v514 = vsel %vm512, 1.0, 0.0
    %v515 = vsel %vm513, 1.0, 0.0
    %v516 = vadd.f32 %v504, %v514
    %v517 = vadd.f32 %v505, %v515
    %v518 = vpack.c.bf16 %v517, %v516
    %v519 = vld [vmem:[#allocation8] sm:$0xf]
    %v520 = vld [vmem:[#allocation8 + $0x4] sm:$0xf]
    %v521 = vld [vmem:[#allocation8 + $0x8] sm:$0xf]
    %v522 = vld [vmem:[#allocation8 + $0xc] sm:$0xf]
    %v523 = vld [vmem:[#allocation8 + $0x10] sm:$0xf]
    %v524 = vld [vmem:[#allocation8 + $0x14] sm:$0xf]
    %v525 = vld [vmem:[#allocation8 + $0x18] sm:$0xf]
    %v526 = vld [vmem:[#allocation8 + $0x1c] sm:$0xf]
    %v527 = vld [vmem:[#allocation8 + $0x20] sm:$0xf]
    %v528 = vld [vmem:[#allocation8 + $0x24] sm:$0xf]
    %v529 = vld [vmem:[#allocation8 + $0x28] sm:$0xf]
    %v530 = vld [vmem:[#allocation8 + $0x2c] sm:$0xf]
    %v531 = vld [vmem:[#allocation8 + $0x30] sm:$0xf]
    %v532 = vld [vmem:[#allocation8 + $0x34] sm:$0xf]
    %v533 = vld [vmem:[#allocation8 + $0x38] sm:$0xf]
    %v534 = vld [vmem:[#allocation8 + $0x3c] sm:$0xf]
    %v551 = vunpack.c.l.b16 %v519
    %v552 = vunpack.c.l.b16 %v520
    %v553 = vunpack.c.l.b16 %v521
    %v554 = vunpack.c.l.b16 %v522
    %v555 = vunpack.c.l.b16 %v523
    %v556 = vunpack.c.l.b16 %v524
    %v557 = vunpack.c.l.b16 %v525
    %v558 = vunpack.c.l.b16 %v526
    %v559 = vunpack.c.l.b16 %v527
    %v560 = vunpack.c.l.b16 %v528
    %v561 = vunpack.c.l.b16 %v529
    %v562 = vunpack.c.l.b16 %v530
    %v563 = vunpack.c.l.b16 %v531
    %v564 = vunpack.c.l.b16 %v532
    %v565 = vunpack.c.l.b16 %v533
    %v566 = vunpack.c.l.b16 %v534
    %v567 = vpack.c.b16 %v552, %v551
    %v568 = vpack.c.b16 %v554, %v553
    %v569 = vpack.c.b16 %v556, %v555
    %v570 = vpack.c.b16 %v558, %v557
    %v571 = vpack.c.b16 %v560, %v559
    %v572 = vpack.c.b16 %v562, %v561
    %v573 = vpack.c.b16 %v564, %v563
    %v574 = vpack.c.b16 %v566, %v565
    %583 = vmatprep.subr.bf16.mxu0 0
    %584 = vmatpush1.bf16.msra.mxu0 %v567
    %585 = vmatprep.subr.bf16.mxu0 0
    %586 = vmatpush1.bf16.msra.mxu0 %v568
    %587 = vmatprep.subr.bf16.mxu0 0
    %588 = vmatpush1.bf16.msra.mxu0 %v569
    %589 = vmatprep.subr.bf16.mxu0 0
    %590 = vmatpush1.bf16.msra.mxu0 %v570
    %591 = vmatprep.subr.bf16.mxu0 0
    %592 = vmatpush1.bf16.msra.mxu0 %v571
    %593 = vmatprep.subr.bf16.mxu0 0
    %594 = vmatpush1.bf16.msra.mxu0 %v572
    %595 = vmatprep.subr.bf16.mxu0 0
    %596 = vmatpush1.bf16.msra.mxu0 %v573
    %597 = vmatprep.subr.bf16.mxu0 0
    %598 = vmatpush1.bf16.msra.mxu0 %v574
    %599 = vmatprep.subr.bf16.mxu0 0
    %600 = vmatpush1.bf16.msra.mxu0 0
    %601 = vmatprep.subr.bf16.mxu0 0
    %602 = vmatpush1.bf16.msra.mxu0 0
    %603 = vmatprep.subr.bf16.mxu0 0
    %604 = vmatpush1.bf16.msra.mxu0 0
    %605 = vmatprep.subr.bf16.mxu0 0
    %606 = vmatpush1.bf16.msra.mxu0 0
    %607 = vmatprep.subr.bf16.mxu0 0
    %608 = vmatpush1.bf16.msra.mxu0 0
    %609 = vmatprep.subr.bf16.mxu0 0
    %610 = vmatpush1.bf16.msra.mxu0 0
    %611 = vmatprep.subr.bf16.mxu0 0
    %612 = vmatpush1.bf16.msra.mxu0 0
    %613 = vmatprep.subr.bf16.mxu0 0
    %614 = vmatpush1.bf16.msra.mxu0 0
    %615 = vmatprep.mubr.bf16.mxu0 0
    %616 = vmatmul.mubr.bf16.gmra.mrb[0].mxu0 %v518
    %v617 = vpop.f32.mrb[0].mxu0
    %v618 = vadd.f32 0.0, %v617
    %v619 = vpop.f32.mrb[0].mxu0
    %v620 = vpop.f32.mrb[0].mxu0
    %v621 = vadd.f32 0.0, %v620
    %v622 = vpop.f32.mrb[0].mxu0
    %623 = vdwg.mxu0
    %v624 = vmul.f32 %v618, 0.2
    %v625 = vmul.f32 %v621, 0.2
    %v626 = vadd.f32 %v454, %v624
    %v627 = vadd.f32 %v455, %v625
    %v628 = vld [vmem:[%s7] sm:$0x1]
    %v629 = vunpack.c.l.bf16 %v628
    %v630 = vlaneseq
    %v631 = vshrl.u32 %v630, 7
    %v632 = vsub.s32 0, %v631
    %v633 = vrot.slane %v629, %v632
    %v634 = vadd.f32 %v626, %v633
    %v635 = vadd.f32 %v627, %v633
    %v636 = vmax.f32 %v634, 0.0
    %v637 = vmax.f32 %v635, 0.0
    %v638 = vpack.c.bf16 %v637, %v636
    %v639 = vld [vmem:[#allocation10] sm:$0xf]
    %v640 = vld [vmem:[#allocation10 + $0x4] sm:$0xf]
    %v641 = vld [vmem:[#allocation10 + $0x8] sm:$0xf]
    %v642 = vld [vmem:[#allocation10 + $0xc] sm:$0xf]
    %v643 = vld [vmem:[#allocation10 + $0x10] sm:$0xf]
    %v644 = vld [vmem:[#allocation10 + $0x14] sm:$0xf]
    %v645 = vld [vmem:[#allocation10 + $0x18] sm:$0xf]
    %v646 = vld [vmem:[#allocation10 + $0x1c] sm:$0xf]
    %v647 = vld [vmem:[#allocation10 + $0x20] sm:$0xf]
    %v648 = vld [vmem:[#allocation10 + $0x24] sm:$0xf]
    %v649 = vld [vmem:[#allocation10 + $0x28] sm:$0xf]
    %v650 = vld [vmem:[#allocation10 + $0x2c] sm:$0xf]
    %v651 = vld [vmem:[#allocation10 + $0x30] sm:$0xf]
    %v652 = vld [vmem:[#allocation10 + $0x34] sm:$0xf]
    %v653 = vld [vmem:[#allocation10 + $0x38] sm:$0xf]
    %v654 = vld [vmem:[#allocation10 + $0x3c] sm:$0xf]
    %v655 = vld [vmem:[%s9] sm:$0x1]
    %v657 = vlaneseq
    %v658 = vshrl.u32 %v657, 7
    %v659 = vsub.s32 0, %v658
    %v660 = vrot.slane %v655, %v659
    %v678 = vunpack.c.l.b16 %v639
    %v679 = vunpack.c.l.b16 %v640
    %v680 = vunpack.c.l.b16 %v641
    %v681 = vunpack.c.l.b16 %v642
    %v682 = vunpack.c.l.b16 %v643
    %v683 = vunpack.c.l.b16 %v644
    %v684 = vunpack.c.l.b16 %v645
    %v685 = vunpack.c.l.b16 %v646
    %v686 = vunpack.c.l.b16 %v647
    %v687 = vunpack.c.l.b16 %v648
    %v688 = vunpack.c.l.b16 %v649
    %v689 = vunpack.c.l.b16 %v650
    %v690 = vunpack.c.l.b16 %v651
    %v691 = vunpack.c.l.b16 %v652
    %v692 = vunpack.c.l.b16 %v653
    %v693 = vunpack.c.l.b16 %v654
    %v694 = vpack.c.b16 %v679, %v678
    %v695 = vpack.c.b16 %v681, %v680
    %v696 = vpack.c.b16 %v683, %v682
    %v697 = vpack.c.b16 %v685, %v684
    %v698 = vpack.c.b16 %v687, %v686
    %v699 = vpack.c.b16 %v689, %v688
    %v700 = vpack.c.b16 %v691, %v690
    %v701 = vpack.c.b16 %v693, %v692
    %710 = vmatprep.subr.bf16.mxu0 0
    %711 = vmatpush1.bf16.msra.mxu0 %v694
    %712 = vmatprep.subr.bf16.mxu0 0
    %713 = vmatpush1.bf16.msra.mxu0 %v695
    %714 = vmatprep.subr.bf16.mxu0 0
    %715 = vmatpush1.bf16.msra.mxu0 %v696
    %716 = vmatprep.subr.bf16.mxu0 0
    %717 = vmatpush1.bf16.msra.mxu0 %v697
    %718 = vmatprep.subr.bf16.mxu0 0
    %719 = vmatpush1.bf16.msra.mxu0 %v698
    %720 = vmatprep.subr.bf16.mxu0 0
    %721 = vmatpush1.bf16.msra.mxu0 %v699
    %722 = vmatprep.subr.bf16.mxu0 0
    %723 = vmatpush1.bf16.msra.mxu0 %v700
    %724 = vmatprep.subr.bf16.mxu0 0
    %725 = vmatpush1.bf16.msra.mxu0 %v701
    %726 = vmatprep.subr.bf16.mxu0 0
    %727 = vmatpush1.bf16.msra.mxu0 0
    %728 = vmatprep.subr.bf16.mxu0 0
    %729 = vmatpush1.bf16.msra.mxu0 0
    %730 = vmatprep.subr.bf16.mxu0 0
    %731 = vmatpush1.bf16.msra.mxu0 0
    %732 = vmatprep.subr.bf16.mxu0 0
    %733 = vmatpush1.bf16.msra.mxu0 0
    %734 = vmatprep.subr.bf16.mxu0 0
    %735 = vmatpush1.bf16.msra.mxu0 0
    %736 = vmatprep.subr.bf16.mxu0 0
    %737 = vmatpush1.bf16.msra.mxu0 0
    %738 = vmatprep.subr.bf16.mxu0 0
    %739 = vmatpush1.bf16.msra.mxu0 0
    %740 = vmatprep.subr.bf16.mxu0 0
    %741 = vmatpush1.bf16.msra.mxu0 0
    %742 = vmatprep.mubr.bf16.mxu0 0
    %743 = vmatmul.mubr.bf16.gmra.mrb[0].mxu0 %v638
    %v744 = vpop.f32.mrb[0].mxu0
    %v745 = vadd.f32 %v660, %v744
    %v746 = vpop.f32.mrb[0].mxu0
    %v747 = vpop.f32.mrb[0].mxu0
    %v748 = vadd.f32 %v660, %v747
    %v749 = vpop.f32.mrb[0].mxu0
    %750 = vdwg.mxu0
    %751 = vst [vmem:[#allocation11] sm:$0xff] %v745
    %752 = vst [vmem:[#allocation11 + $0x8] sm:$0xff] %v748
    // Predicated region
    $region62: #{tpu_custom_call.1} parent=1 // pred_check
      _
    $region63: #{tpu_custom_call.1} parent=1 // pred_check_branch
      %754 = sbr.rel (0) target = $region65
    $region64: #{tpu_custom_call.1} parent=1 // pred_region
      %s756 = ssub.s32 256, 256
      %757 = vsyncadd [#allocation4], %s756
      %s758 = sshll.u32 [#allocation11], 4
      %s759 = int_to_ptr.vmem [resolvable:$true] %s758
      %764 = dma.vmem_to_hbm [thread:$0]  %s759, 256, %s10, [#allocation4], 128, 128, 8
    $region65: #{tpu_custom_call.1} parent=1 // pred_fallthru
      _
    // Predicated region
    $region66: #{tpu_custom_call.1} parent=1 // pred_check
      _
    $region67: #{tpu_custom_call.1} parent=1 // pred_check_branch
      %766 = sbr.rel (0) target = $region69
    $region68: #{tpu_custom_call.1} parent=1 // pred_region
      %767 = dma.done [#allocation4], 256
    $region69: #{tpu_custom_call.1} parent=1 // pred_fallthru
      _
    %768 = vsyncpa [#allocation3], 1
    %769 = vsyncpa [#allocation6], 1
    %770 = vsyncpa [#allocation9], 1
    %771 = vsyncpa [#allocation4], 1

// kernel: tpu_custom_call.1
$region0: #{tpu_custom_call.1}
  #allocation0 [shape = 'u32[]', space=smem, size = 0x4, offset = 0x4, fixed_abs, tag = 'smem constant byte address 0x4 - core index']
  #allocation1 [shape = 'u32[144,128]{1,0:T(1,128)}', space=vmem, size = 0x12000, scoped, tag = 'internal scratch']
  %s0 = inlined_call_operand.vmem [shape: s32[16,2], index: 0, kind: input, shape index: {}]
  %s1 = inlined_call_operand.vmem [shape: s32[16,5], index: 1, kind: input, shape index: {}]
  %s2 = inlined_call_operand.hbm [shape: bf16[16,128], index: 2, kind: input, shape index: {}]
  %s3 = inlined_call_operand.hbm [shape: bf16[128,128], index: 3, kind: input, shape index: {}]
  %s4 = inlined_call_operand.hbm [shape: bf16[128,128], index: 4, kind: input, shape index: {}]
  %s5 = inlined_call_operand.hbm [shape: bf16[128,128], index: 5, kind: input, shape index: {}]
  %s6 = inlined_call_operand.vmem [shape: bf16[128,128], index: 6, kind: input, shape index: {}]
  %s7 = inlined_call_operand.vmem [shape: bf16[1,128], index: 7, kind: input, shape index: {}]
  %s8 = inlined_call_operand.hbm [shape: bf16[128,128], index: 8, kind: input, shape index: {}]
  %s9 = inlined_call_operand.vmem [shape: f32[1,128], index: 9, kind: input, shape index: {}]
  %s10 = inlined_call_operand.hbm [shape: f32[16,128], index: 10, kind: output, shape index: {}]
  %s11 = sld [smem:[#allocation0]]
  $region70: #{tpu_custom_call.1} parent=0
    _
  %s13 = ssub.s32 1, %s11
  %s14 = scalar_select 0, %s13, %s11
  $region1: #{tpu_custom_call.1} parent=0
    #allocation2 [shape = 'u8[4096]{0}', space=vmem, size = 0x1000, scoped, tag = 'input window, operand 2, single buffered']
    #allocation3 [shape = 's32[1]{0}', space=sflag, size = 0x4, scoped, tag = 'scoped memory for tpu_custom_call.1']
    #allocation4 [shape = 's32[1]{0}', space=sflag, size = 0x4, scoped, tag = 'scoped memory for tpu_custom_call.1']
    #allocation5 [shape = 'u8[32768]{0}', space=vmem, size = 0x8000, scoped, tag = 'input window, operand 3, single buffered']
    #allocation6 [shape = 's32[1]{0}', space=sflag, size = 0x4, scoped, tag = 'scoped memory for tpu_custom_call.1']
    #allocation7 [shape = 'u8[32768]{0}', space=vmem, size = 0x8000, scoped, tag = 'input window, operand 4, single buffered']
    #allocation8 [shape = 'u8[32768]{0}', space=vmem, size = 0x8000, scoped, tag = 'input window, operand 5, single buffered']
    #allocation9 [shape = 's32[1]{0}', space=sflag, size = 0x4, scoped, tag = 'scoped memory for tpu_custom_call.1']
    #allocation10 [shape = 'u8[32768]{0}', space=vmem, size = 0x8000, scoped, tag = 'input window, operand 8, single buffered']
    #allocation11 [shape = 'u8[8192]{0}', space=vmem, size = 0x2000, scoped, tag = 'output window, operand 0, single buffered']
    %15 = vsyncpa [#allocation3], 0
    %16 = vsyncpa [#allocation6], 0
    %17 = vsyncpa [#allocation9], 0
    %18 = vsyncpa [#allocation4], 0
    // Predicated region
    $region2: #{tpu_custom_call.1} parent=1 // pred_check
      _
    $region3: #{tpu_custom_call.1} parent=1 // pred_check_branch
      %20 = sbr.rel (0) target = $region5
    $region4: #{tpu_custom_call.1} parent=1 // pred_region
      _
    $region5: #{tpu_custom_call.1} parent=1 // pred_fallthru
      _
    // Predicated region
    $region6: #{tpu_custom_call.1} parent=1 // pred_check
      _
    $region7: #{tpu_custom_call.1} parent=1 // pred_check_branch
      %22 = sbr.rel (0) target = $region9
    $region8: #{tpu_custom_call.1} parent=1 // pred_region
      _
    $region9: #{tpu_custom_call.1} parent=1 // pred_fallthru
      _
    // Predicated region
    $region10: #{tpu_custom_call.1} parent=1 // pred_check
      _
    $region11: #{tpu_custom_call.1} parent=1 // pred_check_branch
      %24 = sbr.rel (0) target = $region13
    $region12: #{tpu_custom_call.1} parent=1 // pred_region
      %s26 = ssub.s32 128, 128
      %27 = vsyncadd [#allocation3], %s26
      %s28 = sshll.u32 [#allocation2], 4
      %s29 = int_to_ptr.vmem [resolvable:$true] %s28
      %34 = dma.hbm_to_vmem [thread:$0]  %s2, 128, %s29, [#allocation3], 64, 64, 4
    $region13: #{tpu_custom_call.1} parent=1 // pred_fallthru
      _
    // Predicated region
    $region14: #{tpu_custom_call.1} parent=1 // pred_check
      _
    $region15: #{tpu_custom_call.1} parent=1 // pred_check_branch
      %36 = sbr.rel (0) target = $region17
    $region16: #{tpu_custom_call.1} parent=1 // pred_region
      %s38 = ssub.s32 1024, 1024
      %39 = vsyncadd [#allocation6], %s38
      %s40 = sshll.u32 [#allocation5], 4
      %s41 = int_to_ptr.vmem [resolvable:$true] %s40
      %46 = dma.hbm_to_vmem [thread:$0]  %s3, 1024, %s41, [#allocation6], 64, 64, 4
    $region17: #{tpu_custom_call.1} parent=1 // pred_fallthru
      _
    // Predicated region
    $region18: #{tpu_custom_call.1} parent=1 // pred_check
      _
    $region19: #{tpu_custom_call.1} parent=1 // pred_check_branch
      %48 = sbr.rel (0) target = $region21
    $region20: #{tpu_custom_call.1} parent=1 // pred_region
      %s50 = ssub.s32 1024, 1024
      %51 = vsyncadd [#allocation6], %s50
      %s52 = sshll.u32 [#allocation7], 4
      %s53 = int_to_ptr.vmem [resolvable:$true] %s52
      %58 = dma.hbm_to_vmem [thread:$0]  %s4, 1024, %s53, [#allocation6], 64, 64, 4
    $region21: #{tpu_custom_call.1} parent=1 // pred_fallthru
      _
    // Predicated region
    $region22: #{tpu_custom_call.1} parent=1 // pred_check
      _
    $region23: #{tpu_custom_call.1} parent=1 // pred_check_branch
      %60 = sbr.rel (0) target = $region25
    $region24: #{tpu_custom_call.1} parent=1 // pred_region
      %s62 = ssub.s32 1024, 1024
      %63 = vsyncadd [#allocation9], %s62
      %s64 = sshll.u32 [#allocation8], 4
      %s65 = int_to_ptr.vmem [resolvable:$true] %s64
      %70 = dma.hbm_to_vmem [thread:$0]  %s5, 1024, %s65, [#allocation9], 64, 64, 4
    $region25: #{tpu_custom_call.1} parent=1 // pred_fallthru
      _
    // Predicated region
    $region26: #{tpu_custom_call.1} parent=1 // pred_check
      _
    $region27: #{tpu_custom_call.1} parent=1 // pred_check_branch
      %72 = sbr.rel (0) target = $region29
    $region28: #{tpu_custom_call.1} parent=1 // pred_region
      _
    $region29: #{tpu_custom_call.1} parent=1 // pred_fallthru
      _
    // Predicated region
    $region30: #{tpu_custom_call.1} parent=1 // pred_check
      _
    $region31: #{tpu_custom_call.1} parent=1 // pred_check_branch
      %74 = sbr.rel (0) target = $region33
    $region32: #{tpu_custom_call.1} parent=1 // pred_region
      _
    $region33: #{tpu_custom_call.1} parent=1 // pred_fallthru
      _
    // Predicated region
    $region34: #{tpu_custom_call.1} parent=1 // pred_check
      _
    $region35: #{tpu_custom_call.1} parent=1 // pred_check_branch
      %76 = sbr.rel (0) target = $region37
    $region36: #{tpu_custom_call.1} parent=1 // pred_region
      %s78 = ssub.s32 1024, 1024
      %79 = vsyncadd [#allocation9], %s78
      %s80 = sshll.u32 [#allocation10], 4
      %s81 = int_to_ptr.vmem [resolvable:$true] %s80
      %86 = dma.hbm_to_vmem [thread:$0]  %s8, 1024, %s81, [#allocation9], 64, 64, 4
    $region37: #{tpu_custom_call.1} parent=1 // pred_fallthru
      _
    // Predicated region
    $region38: #{tpu_custom_call.1} parent=1 // pred_check
      _
    $region39: #{tpu_custom_call.1} parent=1 // pred_check_branch
      %88 = sbr.rel (0) target = $region41
    $region40: #{tpu_custom_call.1} parent=1 // pred_region
      _
    $region41: #{tpu_custom_call.1} parent=1 // pred_fallthru
      _
    // Predicated region
    $region42: #{tpu_custom_call.1} parent=1 // pred_check
      _
    $region43: #{tpu_custom_call.1} parent=1 // pred_check_branch
      %90 = sbr.rel (0) target = $region45
    $region44: #{tpu_custom_call.1} parent=1 // pred_region
      %91 = dma.done [#allocation3], 128
    $region45: #{tpu_custom_call.1} parent=1 // pred_fallthru
      _
    // Predicated region
    $region46: #{tpu_custom_call.1} parent=1 // pred_check
      _
    $region47: #{tpu_custom_call.1} parent=1 // pred_check_branch
      %93 = sbr.rel (0) target = $region49
    $region48: #{tpu_custom_call.1} parent=1 // pred_region
      %94 = dma.done [#allocation6], 1024
    $region49: #{tpu_custom_call.1} parent=1 // pred_fallthru
      _
    // Predicated region
    $region50: #{tpu_custom_call.1} parent=1 // pred_check
      _
    $region51: #{tpu_custom_call.1} parent=1 // pred_check_branch
      %96 = sbr.rel (0) target = $region53
    $region52: #{tpu_custom_call.1} parent=1 // pred_region
      %97 = dma.done [#allocation6], 1024
    $region53: #{tpu_custom_call.1} parent=1 // pred_fallthru
      _
    // Predicated region
    $region54: #{tpu_custom_call.1} parent=1 // pred_check
      _
    $region55: #{tpu_custom_call.1} parent=1 // pred_check_branch
      %99 = sbr.rel (0) target = $region57
    $region56: #{tpu_custom_call.1} parent=1 // pred_region
      %100 = dma.done [#allocation9], 1024
    $region57: #{tpu_custom_call.1} parent=1 // pred_fallthru
      _
    // Predicated region
    $region58: #{tpu_custom_call.1} parent=1 // pred_check
      _
    $region59: #{tpu_custom_call.1} parent=1 // pred_check_branch
      %102 = sbr.rel (0) target = $region61
    $region60: #{tpu_custom_call.1} parent=1 // pred_region
      %103 = dma.done [#allocation9], 1024
    $region61: #{tpu_custom_call.1} parent=1 // pred_fallthru
      _
    %v105 = vld [vmem:[#allocation2] sm:$0xf]
    %v106 = vld [vmem:[#allocation2 + $0x4] sm:$0xf]
    %v107 = vld [vmem:[%s6] sm:$0xf]
    %v108 = vld [vmem:[%s6 + $0x4] sm:$0xf]
    %v109 = vld [vmem:[%s6 + $0x8] sm:$0xf]
    %v110 = vld [vmem:[%s6 + $0xc] sm:$0xf]
    %v111 = vld [vmem:[%s6 + $0x10] sm:$0xf]
    %v112 = vld [vmem:[%s6 + $0x14] sm:$0xf]
    %v113 = vld [vmem:[%s6 + $0x18] sm:$0xf]
    %v114 = vld [vmem:[%s6 + $0x1c] sm:$0xf]
    %v115 = vld [vmem:[%s6 + $0x20] sm:$0xf]
    %v116 = vld [vmem:[%s6 + $0x24] sm:$0xf]
    %v117 = vld [vmem:[%s6 + $0x28] sm:$0xf]
    %v118 = vld [vmem:[%s6 + $0x2c] sm:$0xf]
    %v119 = vld [vmem:[%s6 + $0x30] sm:$0xf]
    %v120 = vld [vmem:[%s6 + $0x34] sm:$0xf]
    %v121 = vld [vmem:[%s6 + $0x38] sm:$0xf]
    %v122 = vld [vmem:[%s6 + $0x3c] sm:$0xf]
    %v123 = vld [vmem:[%s0] sm:$0xff]
    %v124 = vld [vmem:[%s0 + $0x8] sm:$0xff]
    %v125 = vlaneseq
    %v126 = vand.u32 %v125, 127
    %127 = vset.pattern.permute.xlu0 0
    %128 = vperm.xlu0 %127, %v123
    %v129 = vpop.permute.xlu0 %128
    %130 = vset.pattern.permute.xlu0 0
    %131 = vperm.xlu0 %130, %v124
    %v132 = vpop.permute.xlu0 %131
    %vm133 = vcmp.eq.s32.totalorder %v126, %v129
    %vm134 = vcmp.eq.s32.totalorder %v126, %v132
    %v135 = vsel %vm133, 1.0, 0.0
    %v136 = vsel %vm134, 1.0, 0.0
    %v137 = vpack.c.bf16 %v136, %v135
    %v138 = vld [vmem:[#allocation5] sm:$0xf]
    %v139 = vld [vmem:[#allocation5 + $0x4] sm:$0xf]
    %v140 = vld [vmem:[#allocation5 + $0x8] sm:$0xf]
    %v141 = vld [vmem:[#allocation5 + $0xc] sm:$0xf]
    %v142 = vld [vmem:[#allocation5 + $0x10] sm:$0xf]
    %v143 = vld [vmem:[#allocation5 + $0x14] sm:$0xf]
    %v144 = vld [vmem:[#allocation5 + $0x18] sm:$0xf]
    %v145 = vld [vmem:[#allocation5 + $0x1c] sm:$0xf]
    %v146 = vld [vmem:[#allocation5 + $0x20] sm:$0xf]
    %v147 = vld [vmem:[#allocation5 + $0x24] sm:$0xf]
    %v148 = vld [vmem:[#allocation5 + $0x28] sm:$0xf]
    %v149 = vld [vmem:[#allocation5 + $0x2c] sm:$0xf]
    %v150 = vld [vmem:[#allocation5 + $0x30] sm:$0xf]
    %v151 = vld [vmem:[#allocation5 + $0x34] sm:$0xf]
    %v152 = vld [vmem:[#allocation5 + $0x38] sm:$0xf]
    %v153 = vld [vmem:[#allocation5 + $0x3c] sm:$0xf]
    %v170 = vunpack.c.l.b16 %v138
    %v171 = vunpack.c.l.b16 %v139
    %v172 = vunpack.c.l.b16 %v140
    %v173 = vunpack.c.l.b16 %v141
    %v174 = vunpack.c.l.b16 %v142
    %v175 = vunpack.c.l.b16 %v143
    %v176 = vunpack.c.l.b16 %v144
    %v177 = vunpack.c.l.b16 %v145
    %v178 = vunpack.c.l.b16 %v146
    %v179 = vunpack.c.l.b16 %v147
    %v180 = vunpack.c.l.b16 %v148
    %v181 = vunpack.c.l.b16 %v149
    %v182 = vunpack.c.l.b16 %v150
    %v183 = vunpack.c.l.b16 %v151
    %v184 = vunpack.c.l.b16 %v152
    %v185 = vunpack.c.l.b16 %v153
    %v186 = vpack.c.b16 %v171, %v170
    %v187 = vpack.c.b16 %v173, %v172
    %v188 = vpack.c.b16 %v175, %v174
    %v189 = vpack.c.b16 %v177, %v176
    %v190 = vpack.c.b16 %v179, %v178
    %v191 = vpack.c.b16 %v181, %v180
    %v192 = vpack.c.b16 %v183, %v182
    %v193 = vpack.c.b16 %v185, %v184
    %202 = vmatprep.subr.bf16.mxu0 0
    %203 = vmatpush1.bf16.msra.mxu0 %v186
    %204 = vmatprep.subr.bf16.mxu0 0
    %205 = vmatpush1.bf16.msra.mxu0 %v187
    %206 = vmatprep.subr.bf16.mxu0 0
    %207 = vmatpush1.bf16.msra.mxu0 %v188
    %208 = vmatprep.subr.bf16.mxu0 0
    %209 = vmatpush1.bf16.msra.mxu0 %v189
    %210 = vmatprep.subr.bf16.mxu0 0
    %211 = vmatpush1.bf16.msra.mxu0 %v190
    %212 = vmatprep.subr.bf16.mxu0 0
    %213 = vmatpush1.bf16.msra.mxu0 %v191
    %214 = vmatprep.subr.bf16.mxu0 0
    %215 = vmatpush1.bf16.msra.mxu0 %v192
    %216 = vmatprep.subr.bf16.mxu0 0
    %217 = vmatpush1.bf16.msra.mxu0 %v193
    %218 = vmatprep.subr.bf16.mxu0 0
    %219 = vmatpush1.bf16.msra.mxu0 0
    %220 = vmatprep.subr.bf16.mxu0 0
    %221 = vmatpush1.bf16.msra.mxu0 0
    %222 = vmatprep.subr.bf16.mxu0 0
    %223 = vmatpush1.bf16.msra.mxu0 0
    %224 = vmatprep.subr.bf16.mxu0 0
    %225 = vmatpush1.bf16.msra.mxu0 0
    %226 = vmatprep.subr.bf16.mxu0 0
    %227 = vmatpush1.bf16.msra.mxu0 0
    %228 = vmatprep.subr.bf16.mxu0 0
    %229 = vmatpush1.bf16.msra.mxu0 0
    %230 = vmatprep.subr.bf16.mxu0 0
    %231 = vmatpush1.bf16.msra.mxu0 0
    %232 = vmatprep.subr.bf16.mxu0 0
    %233 = vmatpush1.bf16.msra.mxu0 0
    %234 = vmatprep.mubr.bf16.mxu0 0
    %235 = vmatmul.mubr.bf16.gmra.mrb[0].mxu0 %v137
    %v236 = vpop.f32.mrb[0].mxu0
    %v237 = vadd.f32 0.0, %v236
    %v238 = vpop.f32.mrb[0].mxu0
    %v239 = vpop.f32.mrb[0].mxu0
    %v240 = vadd.f32 0.0, %v239
    %v241 = vpop.f32.mrb[0].mxu0
    %242 = vdwg.mxu0
    %v245 = vunpack.c.l.b16 %v105
    %v246 = vunpack.c.l.b16 %v106
    %v247 = vpack.c.b16 %v246, %v245
    %v265 = vunpack.c.l.b16 %v107
    %v266 = vunpack.c.l.b16 %v108
    %v267 = vunpack.c.l.b16 %v109
    %v268 = vunpack.c.l.b16 %v110
    %v269 = vunpack.c.l.b16 %v111
    %v270 = vunpack.c.l.b16 %v112
    %v271 = vunpack.c.l.b16 %v113
    %v272 = vunpack.c.l.b16 %v114
    %v273 = vunpack.c.l.b16 %v115
    %v274 = vunpack.c.l.b16 %v116
    %v275 = vunpack.c.l.b16 %v117
    %v276 = vunpack.c.l.b16 %v118
    %v277 = vunpack.c.l.b16 %v119
    %v278 = vunpack.c.l.b16 %v120
    %v279 = vunpack.c.l.b16 %v121
    %v280 = vunpack.c.l.b16 %v122
    %v281 = vpack.c.b16 %v266, %v265
    %v282 = vpack.c.b16 %v268, %v267
    %v283 = vpack.c.b16 %v270, %v269
    %v284 = vpack.c.b16 %v272, %v271
    %v285 = vpack.c.b16 %v274, %v273
    %v286 = vpack.c.b16 %v276, %v275
    %v287 = vpack.c.b16 %v278, %v277
    %v288 = vpack.c.b16 %v280, %v279
    %297 = vmatprep.subr.bf16.mxu0 0
    %298 = vmatpush1.bf16.msra.mxu0 %v281
    %299 = vmatprep.subr.bf16.mxu0 0
    %300 = vmatpush1.bf16.msra.mxu0 %v282
    %301 = vmatprep.subr.bf16.mxu0 0
    %302 = vmatpush1.bf16.msra.mxu0 %v283
    %303 = vmatprep.subr.bf16.mxu0 0
    %304 = vmatpush1.bf16.msra.mxu0 %v284
    %305 = vmatprep.subr.bf16.mxu0 0
    %306 = vmatpush1.bf16.msra.mxu0 %v285
    %307 = vmatprep.subr.bf16.mxu0 0
    %308 = vmatpush1.bf16.msra.mxu0 %v286
    %309 = vmatprep.subr.bf16.mxu0 0
    %310 = vmatpush1.bf16.msra.mxu0 %v287
    %311 = vmatprep.subr.bf16.mxu0 0
    %312 = vmatpush1.bf16.msra.mxu0 %v288
    %313 = vmatprep.subr.bf16.mxu0 0
    %314 = vmatpush1.bf16.msra.mxu0 0
    %315 = vmatprep.subr.bf16.mxu0 0
    %316 = vmatpush1.bf16.msra.mxu0 0
    %317 = vmatprep.subr.bf16.mxu0 0
    %318 = vmatpush1.bf16.msra.mxu0 0
    %319 = vmatprep.subr.bf16.mxu0 0
    %320 = vmatpush1.bf16.msra.mxu0 0
    %321 = vmatprep.subr.bf16.mxu0 0
    %322 = vmatpush1.bf16.msra.mxu0 0
    %323 = vmatprep.subr.bf16.mxu0 0
    %324 = vmatpush1.bf16.msra.mxu0 0
    %325 = vmatprep.subr.bf16.mxu0 0
    %326 = vmatpush1.bf16.msra.mxu0 0
    %327 = vmatprep.subr.bf16.mxu0 0
    %328 = vmatpush1.bf16.msra.mxu0 0
    %329 = vmatprep.mubr.bf16.mxu0 0
    %330 = vmatmul.mubr.bf16.gmra.mrb[0].mxu0 %v247
    %v331 = vpop.f32.mrb[0].mxu0
    %v332 = vadd.f32 %v237, %v331
    %v333 = vpop.f32.mrb[0].mxu0
    %v334 = vpop.f32.mrb[0].mxu0
    %v335 = vadd.f32 %v240, %v334
    %v336 = vpop.f32.mrb[0].mxu0
    %337 = vdwg.mxu0
    %338 = vset.pattern.permute.xlu0 1
    %339 = vperm.xlu0 %338, %v123
    %v340 = vpop.permute.xlu0 %339
    %341 = vset.pattern.permute.xlu0 1
    %342 = vperm.xlu0 %341, %v124
    %v343 = vpop.permute.xlu0 %342
    %vm344 = vcmp.eq.s32.totalorder %v126, %v340
    %vm345 = vcmp.eq.s32.totalorder %v126, %v343
    %v346 = vsel %vm344, 1.0, 0.0
    %v347 = vsel %vm345, 1.0, 0.0
    %v348 = vpack.c.bf16 %v347, %v346
    %v349 = vld [vmem:[#allocation7] sm:$0xf]
    %v350 = vld [vmem:[#allocation7 + $0x4] sm:$0xf]
    %v351 = vld [vmem:[#allocation7 + $0x8] sm:$0xf]
    %v352 = vld [vmem:[#allocation7 + $0xc] sm:$0xf]
    %v353 = vld [vmem:[#allocation7 + $0x10] sm:$0xf]
    %v354 = vld [vmem:[#allocation7 + $0x14] sm:$0xf]
    %v355 = vld [vmem:[#allocation7 + $0x18] sm:$0xf]
    %v356 = vld [vmem:[#allocation7 + $0x1c] sm:$0xf]
    %v357 = vld [vmem:[#allocation7 + $0x20] sm:$0xf]
    %v358 = vld [vmem:[#allocation7 + $0x24] sm:$0xf]
    %v359 = vld [vmem:[#allocation7 + $0x28] sm:$0xf]
    %v360 = vld [vmem:[#allocation7 + $0x2c] sm:$0xf]
    %v361 = vld [vmem:[#allocation7 + $0x30] sm:$0xf]
    %v362 = vld [vmem:[#allocation7 + $0x34] sm:$0xf]
    %v363 = vld [vmem:[#allocation7 + $0x38] sm:$0xf]
    %v364 = vld [vmem:[#allocation7 + $0x3c] sm:$0xf]
    %v381 = vunpack.c.l.b16 %v349
    %v382 = vunpack.c.l.b16 %v350
    %v383 = vunpack.c.l.b16 %v351
    %v384 = vunpack.c.l.b16 %v352
    %v385 = vunpack.c.l.b16 %v353
    %v386 = vunpack.c.l.b16 %v354
    %v387 = vunpack.c.l.b16 %v355
    %v388 = vunpack.c.l.b16 %v356
    %v389 = vunpack.c.l.b16 %v357
    %v390 = vunpack.c.l.b16 %v358
    %v391 = vunpack.c.l.b16 %v359
    %v392 = vunpack.c.l.b16 %v360
    %v393 = vunpack.c.l.b16 %v361
    %v394 = vunpack.c.l.b16 %v362
    %v395 = vunpack.c.l.b16 %v363
    %v396 = vunpack.c.l.b16 %v364
    %v397 = vpack.c.b16 %v382, %v381
    %v398 = vpack.c.b16 %v384, %v383
    %v399 = vpack.c.b16 %v386, %v385
    %v400 = vpack.c.b16 %v388, %v387
    %v401 = vpack.c.b16 %v390, %v389
    %v402 = vpack.c.b16 %v392, %v391
    %v403 = vpack.c.b16 %v394, %v393
    %v404 = vpack.c.b16 %v396, %v395
    %413 = vmatprep.subr.bf16.mxu0 0
    %414 = vmatpush1.bf16.msra.mxu0 %v397
    %415 = vmatprep.subr.bf16.mxu0 0
    %416 = vmatpush1.bf16.msra.mxu0 %v398
    %417 = vmatprep.subr.bf16.mxu0 0
    %418 = vmatpush1.bf16.msra.mxu0 %v399
    %419 = vmatprep.subr.bf16.mxu0 0
    %420 = vmatpush1.bf16.msra.mxu0 %v400
    %421 = vmatprep.subr.bf16.mxu0 0
    %422 = vmatpush1.bf16.msra.mxu0 %v401
    %423 = vmatprep.subr.bf16.mxu0 0
    %424 = vmatpush1.bf16.msra.mxu0 %v402
    %425 = vmatprep.subr.bf16.mxu0 0
    %426 = vmatpush1.bf16.msra.mxu0 %v403
    %427 = vmatprep.subr.bf16.mxu0 0
    %428 = vmatpush1.bf16.msra.mxu0 %v404
    %429 = vmatprep.subr.bf16.mxu0 0
    %430 = vmatpush1.bf16.msra.mxu0 0
    %431 = vmatprep.subr.bf16.mxu0 0
    %432 = vmatpush1.bf16.msra.mxu0 0
    %433 = vmatprep.subr.bf16.mxu0 0
    %434 = vmatpush1.bf16.msra.mxu0 0
    %435 = vmatprep.subr.bf16.mxu0 0
    %436 = vmatpush1.bf16.msra.mxu0 0
    %437 = vmatprep.subr.bf16.mxu0 0
    %438 = vmatpush1.bf16.msra.mxu0 0
    %439 = vmatprep.subr.bf16.mxu0 0
    %440 = vmatpush1.bf16.msra.mxu0 0
    %441 = vmatprep.subr.bf16.mxu0 0
    %442 = vmatpush1.bf16.msra.mxu0 0
    %443 = vmatprep.subr.bf16.mxu0 0
    %444 = vmatpush1.bf16.msra.mxu0 0
    %445 = vmatprep.mubr.bf16.mxu0 0
    %446 = vmatmul.mubr.bf16.gmra.mrb[0].mxu0 %v348
    %v447 = vpop.f32.mrb[0].mxu0
    %v448 = vadd.f32 0.0, %v447
    %v449 = vpop.f32.mrb[0].mxu0
    %v450 = vpop.f32.mrb[0].mxu0
    %v451 = vadd.f32 0.0, %v450
    %v452 = vpop.f32.mrb[0].mxu0
    %453 = vdwg.mxu0
    %v454 = vadd.f32 %v332, %v448
    %v455 = vadd.f32 %v335, %v451
    %v456 = vld [vmem:[%s1] sm:$0xff]
    %v457 = vld [vmem:[%s1 + $0x8] sm:$0xff]
    %458 = vset.pattern.permute.xlu0 0
    %459 = vperm.xlu0 %458, %v456
    %v460 = vpop.permute.xlu0 %459
    %461 = vset.pattern.permute.xlu0 0
    %462 = vperm.xlu0 %461, %v457
    %v463 = vpop.permute.xlu0 %462
    %vm464 = vcmp.eq.s32.totalorder %v126, %v460
    %vm465 = vcmp.eq.s32.totalorder %v126, %v463
    %v466 = vsel %vm464, 1.0, 0.0
    %v467 = vsel %vm465, 1.0, 0.0
    %v468 = vadd.f32 %v466, 0.0
    %v469 = vadd.f32 %v467, 0.0
    %470 = vset.pattern.permute.xlu0 1
    %471 = vperm.xlu0 %470, %v456
    %v472 = vpop.permute.xlu0 %471
    %473 = vset.pattern.permute.xlu0 1
    %474 = vperm.xlu0 %473, %v457
    %v475 = vpop.permute.xlu0 %474
    %vm476 = vcmp.eq.s32.totalorder %v126, %v472
    %vm477 = vcmp.eq.s32.totalorder %v126, %v475
    %v478 = vsel %vm476, 1.0, 0.0
    %v479 = vsel %vm477, 1.0, 0.0
    %v480 = vadd.f32 %v468, %v478
    %v481 = vadd.f32 %v469, %v479
    %482 = vset.pattern.permute.xlu0 2
    %483 = vperm.xlu0 %482, %v456
    %v484 = vpop.permute.xlu0 %483
    %485 = vset.pattern.permute.xlu0 2
    %486 = vperm.xlu0 %485, %v457
    %v487 = vpop.permute.xlu0 %486
    %vm488 = vcmp.eq.s32.totalorder %v126, %v484
    %vm489 = vcmp.eq.s32.totalorder %v126, %v487
    %v490 = vsel %vm488, 1.0, 0.0
    %v491 = vsel %vm489, 1.0, 0.0
    %v492 = vadd.f32 %v480, %v490
    %v493 = vadd.f32 %v481, %v491
    %494 = vset.pattern.permute.xlu0 3
    %495 = vperm.xlu0 %494, %v456
    %v496 = vpop.permute.xlu0 %495
    %497 = vset.pattern.permute.xlu0 3
    %498 = vperm.xlu0 %497, %v457
    %v499 = vpop.permute.xlu0 %498
    %vm500 = vcmp.eq.s32.totalorder %v126, %v496
    %vm501 = vcmp.eq.s32.totalorder %v126, %v499
    %v502 = vsel %vm500, 1.0, 0.0
    %v503 = vsel %vm501, 1.0, 0.0
    %v504 = vadd.f32 %v492, %v502
    %v505 = vadd.f32 %v493, %v503
    %506 = vset.pattern.permute.xlu0 4
    %507 = vperm.xlu0 %506, %v456
    %v508 = vpop.permute.xlu0 %507
    %509 = vset.pattern.permute.xlu0 4
    %510 = vperm.xlu0 %509, %v457
    %v511 = vpop.permute.xlu0 %510
    %vm512 = vcmp.eq.s32.totalorder %v126, %v508
    %vm513 = vcmp.eq.s32.totalorder %v126, %v511
    %v514 = vsel %vm512, 1.0, 0.0
    %v515 = vsel %vm513, 1.0, 0.0
    %v516 = vadd.f32 %v504, %v514
    %v517 = vadd.f32 %v505, %v515
    %v518 = vpack.c.bf16 %v517, %v516
    %v519 = vld [vmem:[#allocation8] sm:$0xf]
    %v520 = vld [vmem:[#allocation8 + $0x4] sm:$0xf]
    %v521 = vld [vmem:[#allocation8 + $0x8] sm:$0xf]
    %v522 = vld [vmem:[#allocation8 + $0xc] sm:$0xf]
    %v523 = vld [vmem:[#allocation8 + $0x10] sm:$0xf]
    %v524 = vld [vmem:[#allocation8 + $0x14] sm:$0xf]
    %v525 = vld [vmem:[#allocation8 + $0x18] sm:$0xf]
    %v526 = vld [vmem:[#allocation8 + $0x1c] sm:$0xf]
    %v527 = vld [vmem:[#allocation8 + $0x20] sm:$0xf]
    %v528 = vld [vmem:[#allocation8 + $0x24] sm:$0xf]
    %v529 = vld [vmem:[#allocation8 + $0x28] sm:$0xf]
    %v530 = vld [vmem:[#allocation8 + $0x2c] sm:$0xf]
    %v531 = vld [vmem:[#allocation8 + $0x30] sm:$0xf]
    %v532 = vld [vmem:[#allocation8 + $0x34] sm:$0xf]
    %v533 = vld [vmem:[#allocation8 + $0x38] sm:$0xf]
    %v534 = vld [vmem:[#allocation8 + $0x3c] sm:$0xf]
    %v551 = vunpack.c.l.b16 %v519
    %v552 = vunpack.c.l.b16 %v520
    %v553 = vunpack.c.l.b16 %v521
    %v554 = vunpack.c.l.b16 %v522
    %v555 = vunpack.c.l.b16 %v523
    %v556 = vunpack.c.l.b16 %v524
    %v557 = vunpack.c.l.b16 %v525
    %v558 = vunpack.c.l.b16 %v526
    %v559 = vunpack.c.l.b16 %v527
    %v560 = vunpack.c.l.b16 %v528
    %v561 = vunpack.c.l.b16 %v529
    %v562 = vunpack.c.l.b16 %v530
    %v563 = vunpack.c.l.b16 %v531
    %v564 = vunpack.c.l.b16 %v532
    %v565 = vunpack.c.l.b16 %v533
    %v566 = vunpack.c.l.b16 %v534
    %v567 = vpack.c.b16 %v552, %v551
    %v568 = vpack.c.b16 %v554, %v553
    %v569 = vpack.c.b16 %v556, %v555
    %v570 = vpack.c.b16 %v558, %v557
    %v571 = vpack.c.b16 %v560, %v559
    %v572 = vpack.c.b16 %v562, %v561
    %v573 = vpack.c.b16 %v564, %v563
    %v574 = vpack.c.b16 %v566, %v565
    %583 = vmatprep.subr.bf16.mxu0 0
    %584 = vmatpush1.bf16.msra.mxu0 %v567
    %585 = vmatprep.subr.bf16.mxu0 0
    %586 = vmatpush1.bf16.msra.mxu0 %v568
    %587 = vmatprep.subr.bf16.mxu0 0
    %588 = vmatpush1.bf16.msra.mxu0 %v569
    %589 = vmatprep.subr.bf16.mxu0 0
    %590 = vmatpush1.bf16.msra.mxu0 %v570
    %591 = vmatprep.subr.bf16.mxu0 0
    %592 = vmatpush1.bf16.msra.mxu0 %v571
    %593 = vmatprep.subr.bf16.mxu0 0
    %594 = vmatpush1.bf16.msra.mxu0 %v572
    %595 = vmatprep.subr.bf16.mxu0 0
    %596 = vmatpush1.bf16.msra.mxu0 %v573
    %597 = vmatprep.subr.bf16.mxu0 0
    %598 = vmatpush1.bf16.msra.mxu0 %v574
    %599 = vmatprep.subr.bf16.mxu0 0
    %600 = vmatpush1.bf16.msra.mxu0 0
    %601 = vmatprep.subr.bf16.mxu0 0
    %602 = vmatpush1.bf16.msra.mxu0 0
    %603 = vmatprep.subr.bf16.mxu0 0
    %604 = vmatpush1.bf16.msra.mxu0 0
    %605 = vmatprep.subr.bf16.mxu0 0
    %606 = vmatpush1.bf16.msra.mxu0 0
    %607 = vmatprep.subr.bf16.mxu0 0
    %608 = vmatpush1.bf16.msra.mxu0 0
    %609 = vmatprep.subr.bf16.mxu0 0
    %610 = vmatpush1.bf16.msra.mxu0 0
    %611 = vmatprep.subr.bf16.mxu0 0
    %612 = vmatpush1.bf16.msra.mxu0 0
    %613 = vmatprep.subr.bf16.mxu0 0
    %614 = vmatpush1.bf16.msra.mxu0 0
    %615 = vmatprep.mubr.bf16.mxu0 0
    %616 = vmatmul.mubr.bf16.gmra.mrb[0].mxu0 %v518
    %v617 = vpop.f32.mrb[0].mxu0
    %v618 = vadd.f32 0.0, %v617
    %v619 = vpop.f32.mrb[0].mxu0
    %v620 = vpop.f32.mrb[0].mxu0
    %v621 = vadd.f32 0.0, %v620
    %v622 = vpop.f32.mrb[0].mxu0
    %623 = vdwg.mxu0
    %v624 = vmul.f32 %v618, 0.2
    %v625 = vmul.f32 %v621, 0.2
    %v626 = vadd.f32 %v454, %v624
    %v627 = vadd.f32 %v455, %v625
    %v628 = vld [vmem:[%s7] sm:$0x1]
    %v629 = vunpack.c.l.bf16 %v628
    %v630 = vlaneseq
    %v631 = vshrl.u32 %v630, 7
    %v632 = vsub.s32 0, %v631
    %v633 = vrot.slane %v629, %v632
    %v634 = vadd.f32 %v626, %v633
    %v635 = vadd.f32 %v627, %v633
    %v636 = vmax.f32 %v634, 0.0
    %v637 = vmax.f32 %v635, 0.0
    %v638 = vpack.c.bf16 %v637, %v636
    %v639 = vld [vmem:[#allocation10] sm:$0xf]
    %v640 = vld [vmem:[#allocation10 + $0x4] sm:$0xf]
    %v641 = vld [vmem:[#allocation10 + $0x8] sm:$0xf]
    %v642 = vld [vmem:[#allocation10 + $0xc] sm:$0xf]
    %v643 = vld [vmem:[#allocation10 + $0x10] sm:$0xf]
    %v644 = vld [vmem:[#allocation10 + $0x14] sm:$0xf]
    %v645 = vld [vmem:[#allocation10 + $0x18] sm:$0xf]
    %v646 = vld [vmem:[#allocation10 + $0x1c] sm:$0xf]
    %v647 = vld [vmem:[#allocation10 + $0x20] sm:$0xf]
    %v648 = vld [vmem:[#allocation10 + $0x24] sm:$0xf]
    %v649 = vld [vmem:[#allocation10 + $0x28] sm:$0xf]
    %v650 = vld [vmem:[#allocation10 + $0x2c] sm:$0xf]
    %v651 = vld [vmem:[#allocation10 + $0x30] sm:$0xf]
    %v652 = vld [vmem:[#allocation10 + $0x34] sm:$0xf]
    %v653 = vld [vmem:[#allocation10 + $0x38] sm:$0xf]
    %v654 = vld [vmem:[#allocation10 + $0x3c] sm:$0xf]
    %v655 = vld [vmem:[%s9] sm:$0x1]
    %v657 = vlaneseq
    %v658 = vshrl.u32 %v657, 7
    %v659 = vsub.s32 0, %v658
    %v660 = vrot.slane %v655, %v659
    %v678 = vunpack.c.l.b16 %v639
    %v679 = vunpack.c.l.b16 %v640
    %v680 = vunpack.c.l.b16 %v641
    %v681 = vunpack.c.l.b16 %v642
    %v682 = vunpack.c.l.b16 %v643
    %v683 = vunpack.c.l.b16 %v644
    %v684 = vunpack.c.l.b16 %v645
    %v685 = vunpack.c.l.b16 %v646
    %v686 = vunpack.c.l.b16 %v647
    %v687 = vunpack.c.l.b16 %v648
    %v688 = vunpack.c.l.b16 %v649
    %v689 = vunpack.c.l.b16 %v650
    %v690 = vunpack.c.l.b16 %v651
    %v691 = vunpack.c.l.b16 %v652
    %v692 = vunpack.c.l.b16 %v653
    %v693 = vunpack.c.l.b16 %v654
    %v694 = vpack.c.b16 %v679, %v678
    %v695 = vpack.c.b16 %v681, %v680
    %v696 = vpack.c.b16 %v683, %v682
    %v697 = vpack.c.b16 %v685, %v684
    %v698 = vpack.c.b16 %v687, %v686
    %v699 = vpack.c.b16 %v689, %v688
    %v700 = vpack.c.b16 %v691, %v690
    %v701 = vpack.c.b16 %v693, %v692
    %710 = vmatprep.subr.bf16.mxu0 0
    %711 = vmatpush1.bf16.msra.mxu0 %v694
    %712 = vmatprep.subr.bf16.mxu0 0
    %713 = vmatpush1.bf16.msra.mxu0 %v695
    %714 = vmatprep.subr.bf16.mxu0 0
    %715 = vmatpush1.bf16.msra.mxu0 %v696
    %716 = vmatprep.subr.bf16.mxu0 0
    %717 = vmatpush1.bf16.msra.mxu0 %v697
    %718 = vmatprep.subr.bf16.mxu0 0
    %719 = vmatpush1.bf16.msra.mxu0 %v698
    %720 = vmatprep.subr.bf16.mxu0 0
    %721 = vmatpush1.bf16.msra.mxu0 %v699
    %722 = vmatprep.subr.bf16.mxu0 0
    %723 = vmatpush1.bf16.msra.mxu0 %v700
    %724 = vmatprep.subr.bf16.mxu0 0
    %725 = vmatpush1.bf16.msra.mxu0 %v701
    %726 = vmatprep.subr.bf16.mxu0 0
    %727 = vmatpush1.bf16.msra.mxu0 0
    %728 = vmatprep.subr.bf16.mxu0 0
    %729 = vmatpush1.bf16.msra.mxu0 0
    %730 = vmatprep.subr.bf16.mxu0 0
    %731 = vmatpush1.bf16.msra.mxu0 0
    %732 = vmatprep.subr.bf16.mxu0 0
    %733 = vmatpush1.bf16.msra.mxu0 0
    %734 = vmatprep.subr.bf16.mxu0 0
    %735 = vmatpush1.bf16.msra.mxu0 0
    %736 = vmatprep.subr.bf16.mxu0 0
    %737 = vmatpush1.bf16.msra.mxu0 0
    %738 = vmatprep.subr.bf16.mxu0 0
    %739 = vmatpush1.bf16.msra.mxu0 0
    %740 = vmatprep.subr.bf16.mxu0 0
    %741 = vmatpush1.bf16.msra.mxu0 0
    %742 = vmatprep.mubr.bf16.mxu0 0
    %743 = vmatmul.mubr.bf16.gmra.mrb[0].mxu0 %v638
    %v744 = vpop.f32.mrb[0].mxu0
    %v745 = vadd.f32 %v660, %v744
    %v746 = vpop.f32.mrb[0].mxu0
    %v747 = vpop.f32.mrb[0].mxu0
    %v748 = vadd.f32 %v660, %v747
    %v749 = vpop.f32.mrb[0].mxu0
    %750 = vdwg.mxu0
    %751 = vst [vmem:[#allocation11] sm:$0xff] %v745
    %752 = vst [vmem:[#allocation11 + $0x8] sm:$0xff] %v748
    // Predicated region
    $region62: #{tpu_custom_call.1} parent=1 // pred_check
      _
    $region63: #{tpu_custom_call.1} parent=1 // pred_check_branch
      %754 = sbr.rel (0) target = $region65
    $region64: #{tpu_custom_call.1} parent=1 // pred_region
      %s756 = ssub.s32 256, 256
      %757 = vsyncadd [#allocation4], %s756
      %s758 = sshll.u32 [#allocation11], 4
      %s759 = int_to_ptr.vmem [resolvable:$true] %s758
      %764 = dma.vmem_to_hbm [thread:$0]  %s759, 256, %s10, [#allocation4], 128, 128, 8
    $region65: #{tpu_custom_call.1} parent=1 // pred_fallthru
      _
    // Predicated region
    $region66: #{tpu_custom_call.1} parent=1 // pred_check
      _
    $region67: #{tpu_custom_call.1} parent=1 // pred_check_branch
      %766 = sbr.rel (0) target = $region69
    $region68: #{tpu_custom_call.1} parent=1 // pred_region
      %767 = dma.done [#allocation4], 256
    $region69: #{tpu_custom_call.1} parent=1 // pred_fallthru
      _
    %768 = vsyncpa [#allocation3], 1
    %769 = vsyncpa [#allocation6], 1
    %770 = vsyncpa [#allocation9], 1
    %771 = vsyncpa [#allocation4], 1

</llo_original>
